<compile_context>
chip_gen: v6e
topology: v6e:2x2x1
jax: 0.10.0
libtpu: 0.0.40
codegen_flags: <defaults>
</compile_context>

<pallas_src>
import jax
import jax.numpy as jnp
from jax.experimental import pallas as pl
from jax.experimental.pallas import tpu as pltpu


# ----------------------------- Pallas kernel --------------------------------
def _kpe_kernel(kpts_ref, scores_ref,
                w1_ref, t1_ref,
                w2_ref, t2_ref,
                w3_ref, b3_ref,
                o_ref):
    """One (batch, token-tile) block through the full 3-layer MLP.

    kpts_ref   : (1, TM, 2)   keypoint xy per token
    scores_ref : (1, TM, 1)   detection score per token
    w1_ref     : (3, C1)      layer-1 weight, BN folded in
    t1_ref     : (1, C1)      layer-1 folded bias/shift
    w2_ref     : (C1, C2)     layer-2 weight, BN folded in
    t2_ref     : (1, C2)      layer-2 folded bias/shift
    w3_ref     : (C2, F)      layer-3 weight
    b3_ref     : (1, F)       layer-3 bias
    o_ref      : (1, F, TM)   output block, already in (B, F, N) layout
    """
    kpts = kpts_ref[0].astype(jnp.float32)       # (TM, 2)
    sc = scores_ref[0].astype(jnp.float32)       # (TM, 1)

    # Layer 1: Conv1d(3 -> C1) + BN + ReLU.
    # Cin = 3 -> broadcast FMAs on the VPU instead of a ~97%-padded MXU matmul.
    w1 = w1_ref[...]
    h = (kpts[:, 0:1] * w1[0:1, :]
         + kpts[:, 1:2] * w1[1:2, :]
         + sc * w1[2:3, :]
         + t1_ref[...])
    h = jnp.maximum(h, 0.0)

    # Layer 2: Conv1d(C1 -> C2) + BN + ReLU.
    h = jnp.dot(h, w2_ref[...], preferred_element_type=jnp.float32) + t2_ref[...]
    h = jnp.maximum(h, 0.0)

    # Layer 3: Conv1d(C2 -> F), no BN / ReLU.
    h = jnp.dot(h, w3_ref[...], preferred_element_type=jnp.float32) + b3_ref[...]

    # (TM, F) -> (F, TM): token axis becomes the lane dim -> lane-dense,
    # unmasked stores, and the output is already in PyTorch (B, F, N) layout.
    o_ref[0] = h.T.astype(o_ref.dtype)


def _round_up(x, m):
    return ((x + m - 1) // m) * m


def keypoint_encoder_forward(kpts, scores, params, *, tile_rows=1024):
    """kpts: (B, N, 2)  scores: (B, N)  ->  (B, F, N)  (PyTorch NCL layout)."""
    B, N, _ = kpts.shape
    (w1, b1, s1, t1), (w2, b2, s2, t2), (w3, b3) = params
    F = w3.shape[1]

    # --- Fold eval-mode BatchNorm into the conv weights/biases (exact). ---
    # y = (x @ w + b) * s + t  ==  x @ (w * s) + (b * s + t)
    w1f = (w1 * s1).astype(jnp.float32)          # (3, C1)
    t1f = (b1 * s1 + t1).astype(jnp.float32)     # (1, C1)
    w2f = (w2 * s2).astype(jnp.float32)          # (C1, C2)
    t2f = (b2 * s2 + t2).astype(jnp.float32)     # (1, C2)
    w3f = w3.astype(jnp.float32)                 # (C2, F)
    b3f = b3.astype(jnp.float32)                 # (1, F)

    # --- Tile / pad the token axis. ---
    tile_rows = max(128, (tile_rows // 128) * 128)      # lane-dense output tiles
    tm = min(tile_rows, _round_up(N, 128))
    Np = _round_up(N, tm)
    if Np != N:
        kpts = jnp.pad(kpts, ((0, 0), (0, Np - N), (0, 0)))
        scores = jnp.pad(scores, ((0, 0), (0, Np - N)))
    kpts = kpts.astype(jnp.float32)
    scores3 = scores[..., None].astype(jnp.float32)     # (B, Np, 1), free reshape

    grid = (B, Np // tm)
    full = lambda a: pl.BlockSpec(a.shape, lambda b, n: (0,) * a.ndim)

    out = pl.pallas_call(
        _kpe_kernel,
        out_shape=jax.ShapeDtypeStruct((B, F, Np), jnp.float32),
        grid_spec=pltpu.PrefetchScalarGridSpec(
            num_scalar_prefetch=0,
            grid=grid,
            in_specs=[
                pl.BlockSpec((1, tm, 2), lambda b, n: (b, n, 0)),   # kpts
                pl.BlockSpec((1, tm, 1), lambda b, n: (b, n, 0)),   # scores
                full(w1f), full(t1f),
                full(w2f), full(t2f),
                full(w3f), full(b3f),
            ],
            out_specs=pl.BlockSpec((1, F, tm), lambda b, n: (b, 0, n)),
        ),
        compiler_params=pltpu.CompilerParams(
            dimension_semantics=("parallel", "parallel")),
    )(kpts, scores3, w1f, t1f, w2f, t2f, w3f, b3f)

    return out[..., :N] if Np != N else out


# --------------------------- parameter construction --------------------------
def init_params(key, channels):
    """channels = [3, C1, C2, feature_dim]; deterministic synthetic init."""
    params = []
    n_layers = len(channels) - 1
    for i in range(n_layers):
        cin, cout = channels[i], channels[i + 1]
        key, kw, kb, kg, kbeta, km, kv = jax.random.split(key, 7)
        w = jax.random.normal(kw, (cin, cout), jnp.float32) * 0.1  # (Cin, Cout)
        is_last = (i == n_layers - 1)
        if is_last:
            b = jnp.zeros((1, cout), jnp.float32)      # init.constant_(bias, 0.0)
            params.append((w, b))
        else:
            b = jax.random.normal(kb, (1, cout), jnp.float32) * 0.1
            # BatchNorm1d (eval): gamma/beta/running stats as scale + shift.
            gamma = 1.0 + 0.1 * jax.random.normal(kg, (1, cout), jnp.float32)
            beta = 0.1 * jax.random.normal(kbeta, (1, cout), jnp.float32)
            rmean = 0.1 * jax.random.normal(km, (1, cout), jnp.float32)
            rvar = jnp.abs(1.0 + 0.1 * jax.random.normal(kv, (1, cout), jnp.float32))
            eps = 1e-5
            s = gamma / jnp.sqrt(rvar + eps)
            t = beta - rmean * s
            params.append((w, b, s, t))
    return params


# ------------------------------ reference (glue) -----------------------------
def reference_forward(kpts, scores, params):
    # Kept in the original (un-folded) Conv -> BN -> ReLU structural form so it
    # independently validates the BN fold done in the wrapper.
    x = jnp.concatenate([kpts, scores[..., None]], axis=-1)  # (B, N, 3)
    h = x.astype(jnp.float32)
    (w1, b1, s1, t1), (w2, b2, s2, t2), (w3, b3) = params
    h = jnp.maximum((h @ w1 + b1) * s1 + t1, 0.0)
    h = jnp.maximum((h @ w2 + b2) * s2 + t2, 0.0)
    h = h @ w3 + b3
    return h.transpose(0, 2, 1)  # (B, F, N)


# ----------------------------------- main ------------------------------------
if __name__ == "__main__":
    B, N = 2, 500                 # N deliberately not a tile multiple (pad path)
    feature_dim = 32
    layers = (32, 64)
    channels = [3, *layers, feature_dim]

    key = jax.random.PRNGKey(0)
    kp_key, sc_key, prm_key = jax.random.split(key, 3)
    kpts = jax.random.normal(kp_key, (B, N, 2), jnp.float32)
    scores = jax.random.uniform(sc_key, (B, N), jnp.float32)
    params = init_params(prm_key, channels)

    out = keypoint_encoder_forward(kpts, scores, params)
    out = jax.block_until_ready(out)

    ref = reference_forward(kpts, scores, params)
    assert out.shape == (B, feature_dim, N)
    assert jnp.allclose(out, ref, atol=1e-3, rtol=1e-3), (
        float(jnp.max(jnp.abs(out - ref))))

    print("KERNEL_OK")
</pallas_src>

<mosaic_0001>
module attributes {stable_mosaic.version = 11 : i64} {
  func.func @_kpe_kernel(%arg0: i32, %arg1: i32, %arg2: memref<1x512x2xf32, #tpu.memory_space<vmem>>, %arg3: memref<1x512x1xf32, #tpu.memory_space<vmem>>, %arg4: memref<3x32xf32, #tpu.memory_space<vmem>>, %arg5: memref<1x32xf32, #tpu.memory_space<vmem>>, %arg6: memref<32x64xf32, #tpu.memory_space<vmem>>, %arg7: memref<1x64xf32, #tpu.memory_space<vmem>>, %arg8: memref<64x32xf32, #tpu.memory_space<vmem>>, %arg9: memref<1x32xf32, #tpu.memory_space<vmem>>, %arg10: memref<1x32x512xf32, #tpu.memory_space<vmem>>) attributes {dimension_semantics = [#tpu.dimension_semantics<parallel>, #tpu.dimension_semantics<parallel>], iteration_bounds = array<i64: 2, 1>, scalar_prefetch = 0 : i64, scratch_operands = 0 : i64, tpu.core_type = #tpu.core_type<tc>, window_params = [{transform_indices = @transform_0, window_bounds = array<i64: 1, 512, 2>}, {transform_indices = @transform_1, window_bounds = array<i64: 1, 512, 1>}, {pipeline_mode = #tpu.pipeline_mode<synchronous>, transform_indices = @transform_2, window_bounds = array<i64: 3, 32>}, {pipeline_mode = #tpu.pipeline_mode<synchronous>, transform_indices = @transform_3, window_bounds = array<i64: 1, 32>}, {pipeline_mode = #tpu.pipeline_mode<synchronous>, transform_indices = @transform_4, window_bounds = array<i64: 32, 64>}, {pipeline_mode = #tpu.pipeline_mode<synchronous>, transform_indices = @transform_5, window_bounds = array<i64: 1, 64>}, {pipeline_mode = #tpu.pipeline_mode<synchronous>, transform_indices = @transform_6, window_bounds = array<i64: 64, 32>}, {pipeline_mode = #tpu.pipeline_mode<synchronous>, transform_indices = @transform_7, window_bounds = array<i64: 1, 32>}, {transform_indices = @transform_8, window_bounds = array<i64: 1, 32, 512>}]} {
    %c0 = arith.constant 0 : index
    %c0_0 = arith.constant 0 : index
    %c0_1 = arith.constant 0 : index
    %0 = vector.load %arg2[%c0, %c0_0, %c0_1] : memref<1x512x2xf32, #tpu.memory_space<vmem>>, vector<1x512x2xf32>
    %1 = vector.shape_cast %0 : vector<1x512x2xf32> to vector<512x2xf32>
    %c0_2 = arith.constant 0 : index
    %c0_3 = arith.constant 0 : index
    %c0_4 = arith.constant 0 : index
    %2 = vector.load %arg3[%c0_2, %c0_3, %c0_4] : memref<1x512x1xf32, #tpu.memory_space<vmem>>, vector<1x512x1xf32>
    %3 = vector.shape_cast %2 : vector<1x512x1xf32> to vector<512x1xf32>
    %c0_5 = arith.constant 0 : index
    %c0_6 = arith.constant 0 : index
    %4 = vector.load %arg4[%c0_5, %c0_6] : memref<3x32xf32, #tpu.memory_space<vmem>>, vector<3x32xf32>
    %5 = vector.extract_strided_slice %1 {offsets = [0, 0], sizes = [512, 1], strides = [1, 1]} : vector<512x2xf32> to vector<512x1xf32>
    %6 = vector.extract_strided_slice %4 {offsets = [0, 0], sizes = [1, 32], strides = [1, 1]} : vector<3x32xf32> to vector<1x32xf32>
    %7 = vector.broadcast %5 : vector<512x1xf32> to vector<512x32xf32>
    %8 = vector.broadcast %6 : vector<1x32xf32> to vector<512x32xf32>
    %9 = arith.mulf %7, %8 : vector<512x32xf32>
    %10 = vector.extract_strided_slice %1 {offsets = [0, 1], sizes = [512, 1], strides = [1, 1]} : vector<512x2xf32> to vector<512x1xf32>
    %11 = vector.extract_strided_slice %4 {offsets = [1, 0], sizes = [1, 32], strides = [1, 1]} : vector<3x32xf32> to vector<1x32xf32>
    %12 = vector.broadcast %10 : vector<512x1xf32> to vector<512x32xf32>
    %13 = vector.broadcast %11 : vector<1x32xf32> to vector<512x32xf32>
    %14 = arith.mulf %12, %13 : vector<512x32xf32>
    %15 = arith.addf %9, %14 : vector<512x32xf32>
    %16 = vector.extract_strided_slice %4 {offsets = [2, 0], sizes = [1, 32], strides = [1, 1]} : vector<3x32xf32> to vector<1x32xf32>
    %17 = vector.broadcast %3 : vector<512x1xf32> to vector<512x32xf32>
    %18 = vector.broadcast %16 : vector<1x32xf32> to vector<512x32xf32>
    %19 = arith.mulf %17, %18 : vector<512x32xf32>
    %20 = arith.addf %15, %19 : vector<512x32xf32>
    %c0_7 = arith.constant 0 : index
    %c0_8 = arith.constant 0 : index
    %21 = vector.load %arg5[%c0_7, %c0_8] : memref<1x32xf32, #tpu.memory_space<vmem>>, vector<1x32xf32>
    %22 = vector.broadcast %21 : vector<1x32xf32> to vector<512x32xf32>
    %23 = arith.addf %20, %22 : vector<512x32xf32>
    %cst = arith.constant 0.000000e+00 : f32
    %24 = vector.broadcast %cst : f32 to vector<512x32xf32>
    %25 = arith.maximumf %23, %24 : vector<512x32xf32>
    %c0_9 = arith.constant 0 : index
    %c0_10 = arith.constant 0 : index
    %26 = vector.load %arg6[%c0_9, %c0_10] : memref<32x64xf32, #tpu.memory_space<vmem>>, vector<32x64xf32>
    %cst_11 = arith.constant dense<0.000000e+00> : vector<512x64xf32>
    %27 = tpu.matmul %25, %26, %cst_11 {dimension_numbers = #tpu.dot_dimension_numbers<[1], [0], [0], [1], [0, 0, 1, 1], [], []>} : vector<512x32xf32>, vector<32x64xf32>, vector<512x64xf32> -> vector<512x64xf32>
    %c0_12 = arith.constant 0 : index
    %c0_13 = arith.constant 0 : index
    %28 = vector.load %arg7[%c0_12, %c0_13] : memref<1x64xf32, #tpu.memory_space<vmem>>, vector<1x64xf32>
    %29 = vector.broadcast %28 : vector<1x64xf32> to vector<512x64xf32>
    %30 = arith.addf %27, %29 : vector<512x64xf32>
    %cst_14 = arith.constant 0.000000e+00 : f32
    %31 = vector.broadcast %cst_14 : f32 to vector<512x64xf32>
    %32 = arith.maximumf %30, %31 : vector<512x64xf32>
    %c0_15 = arith.constant 0 : index
    %c0_16 = arith.constant 0 : index
    %33 = vector.load %arg8[%c0_15, %c0_16] : memref<64x32xf32, #tpu.memory_space<vmem>>, vector<64x32xf32>
    %cst_17 = arith.constant dense<0.000000e+00> : vector<512x32xf32>
    %34 = tpu.matmul %32, %33, %cst_17 {dimension_numbers = #tpu.dot_dimension_numbers<[1], [0], [0], [1], [0, 0, 1, 1], [], []>} : vector<512x64xf32>, vector<64x32xf32>, vector<512x32xf32> -> vector<512x32xf32>
    %c0_18 = arith.constant 0 : index
    %c0_19 = arith.constant 0 : index
    %35 = vector.load %arg9[%c0_18, %c0_19] : memref<1x32xf32, #tpu.memory_space<vmem>>, vector<1x32xf32>
    %36 = vector.broadcast %35 : vector<1x32xf32> to vector<512x32xf32>
    %37 = arith.addf %34, %36 : vector<512x32xf32>
    %38 = tpu.transpose %37, [1, 0] : vector<512x32xf32> -> vector<32x512xf32>
    %c0_20 = arith.constant 0 : index
    %c0_21 = arith.constant 0 : index
    %c0_22 = arith.constant 0 : index
    %39 = vector.load %arg10[%c0_20, %c0_21, %c0_22] : memref<1x32x512xf32, #tpu.memory_space<vmem>>, vector<1x32x512xf32>
    %40 = vector.shape_cast %39 : vector<1x32x512xf32> to vector<32x512xf32>
    %41 = vector.shape_cast %38 : vector<32x512xf32> to vector<1x32x512xf32>
    tpu.vector_store %arg10[%c0_20, %c0_21, %c0_22], %41 {strides = array<i32>} : memref<1x32x512xf32, #tpu.memory_space<vmem>>, vector<1x32x512xf32>,
    return
  }
  func.func @transform_0(%arg0: i32, %arg1: i32) -> (i32, i32, i32) {
    %c0_i32 = arith.constant 0 : i32
    %c0_i32_0 = arith.constant 0 : i32
    return %arg0, %arg1, %c0_i32 : i32, i32, i32
  }
  func.func @transform_1(%arg0: i32, %arg1: i32) -> (i32, i32, i32) {
    %c0_i32 = arith.constant 0 : i32
    %c0_i32_0 = arith.constant 0 : i32
    return %arg0, %arg1, %c0_i32 : i32, i32, i32
  }
  func.func @transform_2(%arg0: i32, %arg1: i32) -> (i32, i32) {
    %c0_i32 = arith.constant 0 : i32
    %c0_i32_0 = arith.constant 0 : i32
    %c0_i32_1 = arith.constant 0 : i32
    return %c0_i32, %c0_i32_0 : i32, i32
  }
  func.func @transform_3(%arg0: i32, %arg1: i32) -> (i32, i32) {
    %c0_i32 = arith.constant 0 : i32
    %c0_i32_0 = arith.constant 0 : i32
    %c0_i32_1 = arith.constant 0 : i32
    return %c0_i32, %c0_i32_0 : i32, i32
  }
  func.func @transform_4(%arg0: i32, %arg1: i32) -> (i32, i32) {
    %c0_i32 = arith.constant 0 : i32
    %c0_i32_0 = arith.constant 0 : i32
    %c0_i32_1 = arith.constant 0 : i32
    return %c0_i32, %c0_i32_0 : i32, i32
  }
  func.func @transform_5(%arg0: i32, %arg1: i32) -> (i32, i32) {
    %c0_i32 = arith.constant 0 : i32
    %c0_i32_0 = arith.constant 0 : i32
    %c0_i32_1 = arith.constant 0 : i32
    return %c0_i32, %c0_i32_0 : i32, i32
  }
  func.func @transform_6(%arg0: i32, %arg1: i32) -> (i32, i32) {
    %c0_i32 = arith.constant 0 : i32
    %c0_i32_0 = arith.constant 0 : i32
    %c0_i32_1 = arith.constant 0 : i32
    return %c0_i32, %c0_i32_0 : i32, i32
  }
  func.func @transform_7(%arg0: i32, %arg1: i32) -> (i32, i32) {
    %c0_i32 = arith.constant 0 : i32
    %c0_i32_0 = arith.constant 0 : i32
    %c0_i32_1 = arith.constant 0 : i32
    return %c0_i32, %c0_i32_0 : i32, i32
  }
  func.func @transform_8(%arg0: i32, %arg1: i32) -> (i32, i32, i32) {
    %c0_i32 = arith.constant 0 : i32
    %c0_i32_0 = arith.constant 0 : i32
    return %arg0, %c0_i32, %arg1 : i32, i32, i32
  }
}

</mosaic_0001>

<llo_original>
// kernel: tpu_custom_call.1
$region0: #{tpu_custom_call.1}
  #allocation0 [shape = 'u32[]', space=smem, size = 0x4, offset = 0x4, fixed_abs, tag = 'smem constant byte address 0x4 - core index']
  #allocation1 [shape = 'u32[144,128]{1,0:T(1,128)}', space=vmem, size = 0x12000, scoped, tag = 'internal scratch']
  %s0 = inlined_call_operand.vmem [shape: f32[2,512,2], index: 0, kind: input, shape index: {}]
  %s1 = inlined_call_operand.vmem [shape: f32[2,512,1], index: 1, kind: input, shape index: {}]
  %s2 = inlined_call_operand.vmem [shape: f32[3,32], index: 2, kind: input, shape index: {}]
  %s3 = inlined_call_operand.vmem [shape: f32[1,32], index: 3, kind: input, shape index: {}]
  %s4 = inlined_call_operand.vmem [shape: f32[32,64], index: 4, kind: input, shape index: {}]
  %s5 = inlined_call_operand.vmem [shape: f32[1,64], index: 5, kind: input, shape index: {}]
  %s6 = inlined_call_operand.vmem [shape: f32[64,32], index: 6, kind: input, shape index: {}]
  %s7 = inlined_call_operand.vmem [shape: f32[1,32], index: 7, kind: input, shape index: {}]
  %s8 = inlined_call_operand.hbm [shape: f32[2,32,512], index: 8, kind: output, shape index: {}]
  %s9 = sld [smem:[#allocation0]]
  $region65: #{tpu_custom_call.1} parent=0
    _
  %s11 = ssub.s32 1, %s9
  %s12 = scalar_select 0, %s11, %s9
  $region1: #{tpu_custom_call.1} parent=0
    #allocation2 [shape = 'u8[131072]{0}', space=vmem, size = 0x20000, scoped, tag = 'output window, operand 0']
    #allocation3 [shape = 's32[2]{0}', space=sflag, size = 0x8, scoped, tag = 'scoped memory for tpu_custom_call.1']
    %13 = vsyncpa [#allocation3], 0
    %s14 = scalar_lea.sflag [#allocation3], 1
    %15 = vsyncpa %s14, 0
    loop: start=0, step=1, limit=4
    $region2: #{tpu_custom_call.1} parent=1 // loop_pre_header
      _
    $region3: #{tpu_custom_call.1} parent=1 // loop_header
      %s17 = sphi 0, %s21
      %p18 = scmp.ge.s32.totalorder %s17, 4
      %s24 = sphi 0, %s36
      %s25 = sphi 0, %s32
      %s26 = sphi 0, %s24
      %s27 = sphi 0, %s25
      %s28 = sphi 0, %s26
      %s29 = sphi 0, %s27
      %s41 = sphi 0, %s43
      %s44 = sphi 0, %s41
      %s45 = sphi 0, %s44
      %s61 = sphi 0, %s45
      %s69 = sphi 0, %s71
      %s72 = sphi 0, %s69
      %s73 = sphi 0, %s72
      %s89 = sphi 0, %s73
      %s93 = sphi 0, %s93
      %s95 = sphi 0, %s93
      %s96 = sphi 0, %s95
      %s110 = sphi 0, %s96
      %s114 = sphi 0, %s114
      %s116 = sphi 0, %s114
      %s117 = sphi 0, %s116
      %s131 = sphi 0, %s117
      %s135 = sphi 0, %s135
      %s137 = sphi 0, %s135
      %s138 = sphi 0, %s137
      %s152 = sphi 0, %s138
      %s156 = sphi 0, %s156
      %s158 = sphi 0, %s156
      %s159 = sphi 0, %s158
      %s173 = sphi 0, %s159
      %s177 = sphi 0, %s177
      %s179 = sphi 0, %s177
      %s180 = sphi 0, %s179
      %s194 = sphi 0, %s180
      %s198 = sphi 0, %s198
      %s200 = sphi 0, %s198
      %s201 = sphi 0, %s200
      %s215 = sphi 0, %s201
      %s223 = sphi 0, %s225
      %s226 = sphi 0, %s223
      %s227 = sphi 0, %s226
      %s243 = sphi 0, %s227
    $region4: #{tpu_custom_call.1} parent=1 // loop_header_branch
      %20 = sbr.rel (%p18) target = $region8
    $region5: #{tpu_custom_call.1} parent=1 // loop_body
      %s22 = ssub.s32 %s17, 1
      %s23 = ssub.s32 %s17, 2
      %s30 = sadd.s32 1, %s25
      %p31 = scmp.ge.s32.totalorder %s30, 1
      %s32 = scalar_select %p31, 0, %s30
      %s33 = sadd.s32 1, %s24
      %s34 = scalar_select %p31, %s33, %s24
      %p35 = scmp.ge.s32.totalorder %s34, 2
      %s36 = scalar_select %p35, 0, %s34
      %s37 = ssub.s32 %s24, %s36
      %s38 = ssub.s32 %s25, %s32
      %s39 = sor.u32 %s37, %s38
      %p40 = scmp.eq.s32.totalorder %s39, 0
      %s42 = sadd.s32 %s41, 1
      %s43 = scalar_select %p40, %s41, %s42
      %p46 = pneg %p40
      %p47 = scmp.eq.s32.totalorder %s17, 1
      %p48 = por %p46, %p47
      %p49 = scmp.ne.s32.totalorder %s41, %s44
      %p50 = scmp.eq.s32.totalorder %s17, 0
      %p51 = por %p49, %p50
      %p52 = scmp.ne.s32.totalorder %s41, %s44
      %p53 = scmp.eq.s32.totalorder %s22, 1
      %p54 = por %p52, %p53
      %p55 = scmp.ne.s32.totalorder %s44, %s45
      %p56 = scmp.eq.s32.totalorder %s22, 0
      %p57 = por %p55, %p56
      %p58 = scmp.ne.s32.totalorder %s44, %s45
      %p59 = scmp.eq.s32.totalorder %s23, 1
      %p60 = por %p58, %p59
      %p62 = scmp.ne.s32.totalorder %s45, %s61
      %p63 = scmp.eq.s32.totalorder %s23, 0
      %p64 = por %p62, %p63
      %s65 = ssub.s32 %s24, %s36
      %s66 = ssub.s32 %s25, %s32
      %s67 = sor.u32 %s65, %s66
      %p68 = scmp.eq.s32.totalorder %s67, 0
      %s70 = sadd.s32 %s69, 1
      %s71 = scalar_select %p68, %s69, %s70
      %p74 = pneg %p68
      %p75 = scmp.eq.s32.totalorder %s17, 1
      %p76 = por %p74, %p75
      %p77 = scmp.ne.s32.totalorder %s69, %s72
      %p78 = scmp.eq.s32.totalorder %s17, 0
      %p79 = por %p77, %p78
      %p80 = scmp.ne.s32.totalorder %s69, %s72
      %p81 = scmp.eq.s32.totalorder %s22, 1
      %p82 = por %p80, %p81
      %p83 = scmp.ne.s32.totalorder %s72, %s73
      %p84 = scmp.eq.s32.totalorder %s22, 0
      %p85 = por %p83, %p84
      %p86 = scmp.ne.s32.totalorder %s72, %s73
      %p87 = scmp.eq.s32.totalorder %s23, 1
      %p88 = por %p86, %p87
      %p90 = scmp.ne.s32.totalorder %s73, %s89
      %p91 = scmp.eq.s32.totalorder %s23, 0
      %p92 = por %p90, %p91
      %s94 = sadd.s32 %s93, 1
      %p97 = scmp.eq.s32.totalorder %s17, 1
      %p98 = scmp.ne.s32.totalorder %s93, %s95
      %p99 = scmp.eq.s32.totalorder %s17, 0
      %p100 = por %p98, %p99
      %p101 = scmp.ne.s32.totalorder %s93, %s95
      %p102 = scmp.eq.s32.totalorder %s22, 1
      %p103 = por %p101, %p102
      %p104 = scmp.ne.s32.totalorder %s95, %s96
      %p105 = scmp.eq.s32.totalorder %s22, 0
      %p106 = por %p104, %p105
      %p107 = scmp.ne.s32.totalorder %s95, %s96
      %p108 = scmp.eq.s32.totalorder %s23, 1
      %p109 = por %p107, %p108
      %p111 = scmp.ne.s32.totalorder %s96, %s110
      %p112 = scmp.eq.s32.totalorder %s23, 0
      %p113 = por %p111, %p112
      %s115 = sadd.s32 %s114, 1
      %p118 = scmp.eq.s32.totalorder %s17, 1
      %p119 = scmp.ne.s32.totalorder %s114, %s116
      %p120 = scmp.eq.s32.totalorder %s17, 0
      %p121 = por %p119, %p120
      %p122 = scmp.ne.s32.totalorder %s114, %s116
      %p123 = scmp.eq.s32.totalorder %s22, 1
      %p124 = por %p122, %p123
      %p125 = scmp.ne.s32.totalorder %s116, %s117
      %p126 = scmp.eq.s32.totalorder %s22, 0
      %p127 = por %p125, %p126
      %p128 = scmp.ne.s32.totalorder %s116, %s117
      %p129 = scmp.eq.s32.totalorder %s23, 1
      %p130 = por %p128, %p129
      %p132 = scmp.ne.s32.totalorder %s117, %s131
      %p133 = scmp.eq.s32.totalorder %s23, 0
      %p134 = por %p132, %p133
      %s136 = sadd.s32 %s135, 1
      %p139 = scmp.eq.s32.totalorder %s17, 1
      %p140 = scmp.ne.s32.totalorder %s135, %s137
      %p141 = scmp.eq.s32.totalorder %s17, 0
      %p142 = por %p140, %p141
      %p143 = scmp.ne.s32.totalorder %s135, %s137
      %p144 = scmp.eq.s32.totalorder %s22, 1
      %p145 = por %p143, %p144
      %p146 = scmp.ne.s32.totalorder %s137, %s138
      %p147 = scmp.eq.s32.totalorder %s22, 0
      %p148 = por %p146, %p147
      %p149 = scmp.ne.s32.totalorder %s137, %s138
      %p150 = scmp.eq.s32.totalorder %s23, 1
      %p151 = por %p149, %p150
      %p153 = scmp.ne.s32.totalorder %s138, %s152
      %p154 = scmp.eq.s32.totalorder %s23, 0
      %p155 = por %p153, %p154
      %s157 = sadd.s32 %s156, 1
      %p160 = scmp.eq.s32.totalorder %s17, 1
      %p161 = scmp.ne.s32.totalorder %s156, %s158
      %p162 = scmp.eq.s32.totalorder %s17, 0
      %p163 = por %p161, %p162
      %p164 = scmp.ne.s32.totalorder %s156, %s158
      %p165 = scmp.eq.s32.totalorder %s22, 1
      %p166 = por %p164, %p165
      %p167 = scmp.ne.s32.totalorder %s158, %s159
      %p168 = scmp.eq.s32.totalorder %s22, 0
      %p169 = por %p167, %p168
      %p170 = scmp.ne.s32.totalorder %s158, %s159
      %p171 = scmp.eq.s32.totalorder %s23, 1
      %p172 = por %p170, %p171
      %p174 = scmp.ne.s32.totalorder %s159, %s173
      %p175 = scmp.eq.s32.totalorder %s23, 0
      %p176 = por %p174, %p175
      %s178 = sadd.s32 %s177, 1
      %p181 = scmp.eq.s32.totalorder %s17, 1
      %p182 = scmp.ne.s32.totalorder %s177, %s179
      %p183 = scmp.eq.s32.totalorder %s17, 0
      %p184 = por %p182, %p183
      %p185 = scmp.ne.s32.totalorder %s177, %s179
      %p186 = scmp.eq.s32.totalorder %s22, 1
      %p187 = por %p185, %p186
      %p188 = scmp.ne.s32.totalorder %s179, %s180
      %p189 = scmp.eq.s32.totalorder %s22, 0
      %p190 = por %p188, %p189
      %p191 = scmp.ne.s32.totalorder %s179, %s180
      %p192 = scmp.eq.s32.totalorder %s23, 1
      %p193 = por %p191, %p192
      %p195 = scmp.ne.s32.totalorder %s180, %s194
      %p196 = scmp.eq.s32.totalorder %s23, 0
      %p197 = por %p195, %p196
      %s199 = sadd.s32 %s198, 1
      %p202 = scmp.eq.s32.totalorder %s17, 1
      %p203 = scmp.ne.s32.totalorder %s198, %s200
      %p204 = scmp.eq.s32.totalorder %s17, 0
      %p205 = por %p203, %p204
      %p206 = scmp.ne.s32.totalorder %s198, %s200
      %p207 = scmp.eq.s32.totalorder %s22, 1
      %p208 = por %p206, %p207
      %p209 = scmp.ne.s32.totalorder %s200, %s201
      %p210 = scmp.eq.s32.totalorder %s22, 0
      %p211 = por %p209, %p210
      %p212 = scmp.ne.s32.totalorder %s200, %s201
      %p213 = scmp.eq.s32.totalorder %s23, 1
      %p214 = por %p212, %p213
      %p216 = scmp.ne.s32.totalorder %s201, %s215
      %p217 = scmp.eq.s32.totalorder %s23, 0
      %p218 = por %p216, %p217
      %s219 = ssub.s32 %s24, %s36
      %s220 = ssub.s32 %s25, %s32
      %s221 = sor.u32 %s219, %s220
      %p222 = scmp.eq.s32.totalorder %s221, 0
      %s224 = sadd.s32 %s223, 1
      %s225 = scalar_select %p222, %s223, %s224
      %p228 = pneg %p222
      %p229 = scmp.eq.s32.totalorder %s17, 1
      %p230 = por %p228, %p229
      %p231 = scmp.ne.s32.totalorder %s223, %s226
      %p232 = scmp.eq.s32.totalorder %s17, 0
      %p233 = por %p231, %p232
      %p234 = scmp.ne.s32.totalorder %s223, %s226
      %p235 = scmp.eq.s32.totalorder %s22, 1
      %p236 = por %p234, %p235
      %p237 = scmp.ne.s32.totalorder %s226, %s227
      %p238 = scmp.eq.s32.totalorder %s22, 0
      %p239 = por %p237, %p238
      %p240 = scmp.ne.s32.totalorder %s226, %s227
      %p241 = scmp.eq.s32.totalorder %s23, 1
      %p242 = por %p240, %p241
      %p244 = scmp.ne.s32.totalorder %s227, %s243
      %p245 = scmp.eq.s32.totalorder %s23, 0
      %p246 = por %p244, %p245
      %p247 = scmp.le.s32.totalorder 1, %s17
      %p248 = scmp.lt.s32.totalorder %s17, 3
      %p249 = pnand %p247, %p248
      %p250 = pneg %p249
      // Predicated region
      $region9: #{tpu_custom_call.1} parent=5 // pred_check
        _
      $region10: #{tpu_custom_call.1} parent=5 // pred_check_branch
        %252 = sbr.rel (%p249) target = $region12
      $region11: #{tpu_custom_call.1} parent=5 // pred_region
        %s253 = ssub.s32 %s17, 1
        // Predicated region
        $region13: #{tpu_custom_call.1} parent=11 // pred_check
          %p254 = pneg %p106
        $region14: #{tpu_custom_call.1} parent=11 // pred_check_branch
          %256 = sbr.rel (%p254) target = $region16
        $region15: #{tpu_custom_call.1} parent=11 // pred_region
          _
        $region16: #{tpu_custom_call.1} parent=11 // pred_fallthru
          _
        // Predicated region
        $region17: #{tpu_custom_call.1} parent=11 // pred_check
          %p257 = pneg %p127
        $region18: #{tpu_custom_call.1} parent=11 // pred_check_branch
          %259 = sbr.rel (%p257) target = $region20
        $region19: #{tpu_custom_call.1} parent=11 // pred_region
          _
        $region20: #{tpu_custom_call.1} parent=11 // pred_fallthru
          _
        // Predicated region
        $region21: #{tpu_custom_call.1} parent=11 // pred_check
          %p260 = pneg %p148
        $region22: #{tpu_custom_call.1} parent=11 // pred_check_branch
          %262 = sbr.rel (%p260) target = $region24
        $region23: #{tpu_custom_call.1} parent=11 // pred_region
          _
        $region24: #{tpu_custom_call.1} parent=11 // pred_fallthru
          _
        // Predicated region
        $region25: #{tpu_custom_call.1} parent=11 // pred_check
          %p263 = pneg %p169
        $region26: #{tpu_custom_call.1} parent=11 // pred_check_branch
          %265 = sbr.rel (%p263) target = $region28
        $region27: #{tpu_custom_call.1} parent=11 // pred_region
          _
        $region28: #{tpu_custom_call.1} parent=11 // pred_fallthru
          _
        // Predicated region
        $region29: #{tpu_custom_call.1} parent=11 // pred_check
          %p266 = pneg %p190
        $region30: #{tpu_custom_call.1} parent=11 // pred_check_branch
          %268 = sbr.rel (%p266) target = $region32
        $region31: #{tpu_custom_call.1} parent=11 // pred_region
          _
        $region32: #{tpu_custom_call.1} parent=11 // pred_fallthru
          _
        // Predicated region
        $region33: #{tpu_custom_call.1} parent=11 // pred_check
          %p269 = pneg %p211
        $region34: #{tpu_custom_call.1} parent=11 // pred_check_branch
          %271 = sbr.rel (%p269) target = $region36
        $region35: #{tpu_custom_call.1} parent=11 // pred_region
          _
        $region36: #{tpu_custom_call.1} parent=11 // pred_fallthru
          _
      $region12: #{tpu_custom_call.1} parent=5 // pred_fallthru
        _
      %p272 = scmp.lt.s32.totalorder %s17, 2
      // Predicated region
      $region37: #{tpu_custom_call.1} parent=5 // pred_check
        %p273 = pneg %p272
      $region38: #{tpu_custom_call.1} parent=5 // pred_check_branch
        %275 = sbr.rel (%p273) target = $region40
      $region39: #{tpu_custom_call.1} parent=5 // pred_region
        // Predicated region
        $region41: #{tpu_custom_call.1} parent=39 // pred_check
          %p276 = pneg %p51
        $region42: #{tpu_custom_call.1} parent=39 // pred_check_branch
          %278 = sbr.rel (%p276) target = $region44
        $region43: #{tpu_custom_call.1} parent=39 // pred_region
          %s279 = smul.u32 64, %s25
          %p280 = scmp.lt.s32.totalorder %s24, 1
          %s281 = scalar_select %p280, %s24, 1
          %p282 = scmp.lt.s32.totalorder %s279, 63
          %s283 = scalar_select %p282, %s279, 63
          %s284 = smul.addr %s281, 64
          %s285 = sadd.s32 %s283, %s284
          %s286 = smul.addr %s285, 8
          %s287 = scalar_lea.vmem %s0, %s286
          %s288 = smul.u32 64, %s25
        $region44: #{tpu_custom_call.1} parent=39 // pred_fallthru
          _
        // Predicated region
        $region45: #{tpu_custom_call.1} parent=39 // pred_check
          %p289 = pneg %p79
        $region46: #{tpu_custom_call.1} parent=39 // pred_check_branch
          %291 = sbr.rel (%p289) target = $region48
        $region47: #{tpu_custom_call.1} parent=39 // pred_region
          %s292 = smul.u32 64, %s25
          %p293 = scmp.lt.s32.totalorder %s24, 1
          %s294 = scalar_select %p293, %s24, 1
          %p295 = scmp.lt.s32.totalorder %s292, 63
          %s296 = scalar_select %p295, %s292, 63
          %s297 = smul.addr %s294, 64
          %s298 = sadd.s32 %s296, %s297
          %s299 = smul.addr %s298, 8
          %s300 = scalar_lea.vmem %s1, %s299
          %s301 = smul.u32 64, %s25
        $region48: #{tpu_custom_call.1} parent=39 // pred_fallthru
          _
      $region40: #{tpu_custom_call.1} parent=5 // pred_fallthru
        _
      %p302 = scmp.le.s32.totalorder 1, %s17
      %p303 = scmp.lt.s32.totalorder %s17, 3
      %p304 = pnand %p302, %p303
      %p305 = pneg %p304
      // Predicated region
      $region49: #{tpu_custom_call.1} parent=5 // pred_check
        _
      $region50: #{tpu_custom_call.1} parent=5 // pred_check_branch
        %307 = sbr.rel (%p304) target = $region52
      $region51: #{tpu_custom_call.1} parent=5 // pred_region
        %s308 = ssub.s32 %s17, 1
        %s309 = smul.u32 64, %s27
        %p310 = scmp.lt.s32.totalorder %s26, 1
        %s311 = scalar_select %p310, %s26, 1
        %p312 = scmp.lt.s32.totalorder %s309, 63
        %s313 = scalar_select %p312, %s309, 63
        %s314 = smul.addr %s311, 64
        %s315 = sadd.s32 %s313, %s314
        %s316 = smul.addr %s315, 8
        %s317 = scalar_lea.vmem %s0, %s316
        %p318 = pneg %p57
        %p319 = pneg %p54
        %s320 = smul.u32 64, %s27
        %p321 = scmp.lt.s32.totalorder %s26, 1
        %s322 = scalar_select %p321, %s26, 1
        %p323 = scmp.lt.s32.totalorder %s320, 63
        %s324 = scalar_select %p323, %s320, 63
        %s325 = smul.addr %s322, 64
        %s326 = sadd.s32 %s324, %s325
        %s327 = smul.addr %s326, 8
        %s328 = scalar_lea.vmem %s1, %s327
        %p329 = pneg %p85
        %p330 = pneg %p82
        %p331 = pneg %p106
        %p332 = pneg %p103
        %p333 = pneg %p127
        %p334 = pneg %p124
        %p335 = pneg %p148
        %p336 = pneg %p145
        %p337 = pneg %p169
        %p338 = pneg %p166
        %p339 = pneg %p190
        %p340 = pneg %p187
        %p341 = pneg %p211
        %p342 = pneg %p208
        %p343 = pneg %p239
        %p344 = pneg %p236
        %s345 = sand.u32 %s226, 1
        %s346 = scalar_lea.sflag [#allocation3], %s345
        %s347 = sand.u32 %s226, 1
        %s348 = smul.addr %s347, 128
        %s349 = scalar_lea.vmem [#allocation2], %s348
        %s350 = smul.u32 64, %s27
        %p351 = scmp.lt.s32.totalorder %s26, 1
        %s352 = scalar_select %p351, %s26, 1
        %p353 = scmp.lt.s32.totalorder %s350, 63
        %s354 = scalar_select %p353, %s350, 63
        %s355 = smul.addr %s352, 64
        %s356 = sadd.s32 %s354, %s355
        %s357 = smul.addr %s356, 8
        %s358 = scalar_lea.vmem %s0, %s357
        %s359 = smul.u32 64, %s27
        %s360 = smul.u32 64, %s27
        %p361 = scmp.lt.s32.totalorder %s26, 1
        %s362 = scalar_select %p361, %s26, 1
        %p363 = scmp.lt.s32.totalorder %s360, 63
        %s364 = scalar_select %p363, %s360, 63
        %s365 = smul.addr %s362, 64
        %s366 = sadd.s32 %s364, %s365
        %s367 = smul.addr %s366, 8
        %s368 = scalar_lea.vmem %s1, %s367
        %s369 = smul.u32 64, %s27
        %s370 = smul.u32 4, %s27
        %v371 = vld [vmem:[%s358] sm:$0xff]
        %v372 = vld [vmem:[%s358 + $0x8] sm:$0xff]
        %v373 = vld [vmem:[%s358 + $0x10] sm:$0xff]
        %v374 = vld [vmem:[%s358 + $0x18] sm:$0xff]
        %v375 = vld [vmem:[%s358 + $0x20] sm:$0xff]
        %v376 = vld [vmem:[%s358 + $0x28] sm:$0xff]
        %v377 = vld [vmem:[%s358 + $0x30] sm:$0xff]
        %v378 = vld [vmem:[%s358 + $0x38] sm:$0xff]
        %v379 = vld [vmem:[%s358 + $0x40] sm:$0xff]
        %v380 = vld [vmem:[%s358 + $0x48] sm:$0xff]
        %v381 = vld [vmem:[%s358 + $0x50] sm:$0xff]
        %v382 = vld [vmem:[%s358 + $0x58] sm:$0xff]
        %v383 = vld [vmem:[%s358 + $0x60] sm:$0xff]
        %v384 = vld [vmem:[%s358 + $0x68] sm:$0xff]
        %v385 = vld [vmem:[%s358 + $0x70] sm:$0xff]
        %v386 = vld [vmem:[%s358 + $0x78] sm:$0xff]
        %v387 = vld [vmem:[%s358 + $0x80] sm:$0xff]
        %v388 = vld [vmem:[%s358 + $0x88] sm:$0xff]
        %v389 = vld [vmem:[%s358 + $0x90] sm:$0xff]
        %v390 = vld [vmem:[%s358 + $0x98] sm:$0xff]
        %v391 = vld [vmem:[%s358 + $0xa0] sm:$0xff]
        %v392 = vld [vmem:[%s358 + $0xa8] sm:$0xff]
        %v393 = vld [vmem:[%s358 + $0xb0] sm:$0xff]
        %v394 = vld [vmem:[%s358 + $0xb8] sm:$0xff]
        %v395 = vld [vmem:[%s358 + $0xc0] sm:$0xff]
        %v396 = vld [vmem:[%s358 + $0xc8] sm:$0xff]
        %v397 = vld [vmem:[%s358 + $0xd0] sm:$0xff]
        %v398 = vld [vmem:[%s358 + $0xd8] sm:$0xff]
        %v399 = vld [vmem:[%s358 + $0xe0] sm:$0xff]
        %v400 = vld [vmem:[%s358 + $0xe8] sm:$0xff]
        %v401 = vld [vmem:[%s358 + $0xf0] sm:$0xff]
        %v402 = vld [vmem:[%s358 + $0xf8] sm:$0xff]
        %v403 = vld [vmem:[%s358 + $0x100] sm:$0xff]
        %v404 = vld [vmem:[%s358 + $0x108] sm:$0xff]
        %v405 = vld [vmem:[%s358 + $0x110] sm:$0xff]
        %v406 = vld [vmem:[%s358 + $0x118] sm:$0xff]
        %v407 = vld [vmem:[%s358 + $0x120] sm:$0xff]
        %v408 = vld [vmem:[%s358 + $0x128] sm:$0xff]
        %v409 = vld [vmem:[%s358 + $0x130] sm:$0xff]
        %v410 = vld [vmem:[%s358 + $0x138] sm:$0xff]
        %v411 = vld [vmem:[%s358 + $0x140] sm:$0xff]
        %v412 = vld [vmem:[%s358 + $0x148] sm:$0xff]
        %v413 = vld [vmem:[%s358 + $0x150] sm:$0xff]
        %v414 = vld [vmem:[%s358 + $0x158] sm:$0xff]
        %v415 = vld [vmem:[%s358 + $0x160] sm:$0xff]
        %v416 = vld [vmem:[%s358 + $0x168] sm:$0xff]
        %v417 = vld [vmem:[%s358 + $0x170] sm:$0xff]
        %v418 = vld [vmem:[%s358 + $0x178] sm:$0xff]
        %v419 = vld [vmem:[%s358 + $0x180] sm:$0xff]
        %v420 = vld [vmem:[%s358 + $0x188] sm:$0xff]
        %v421 = vld [vmem:[%s358 + $0x190] sm:$0xff]
        %v422 = vld [vmem:[%s358 + $0x198] sm:$0xff]
        %v423 = vld [vmem:[%s358 + $0x1a0] sm:$0xff]
        %v424 = vld [vmem:[%s358 + $0x1a8] sm:$0xff]
        %v425 = vld [vmem:[%s358 + $0x1b0] sm:$0xff]
        %v426 = vld [vmem:[%s358 + $0x1b8] sm:$0xff]
        %v427 = vld [vmem:[%s358 + $0x1c0] sm:$0xff]
        %v428 = vld [vmem:[%s358 + $0x1c8] sm:$0xff]
        %v429 = vld [vmem:[%s358 + $0x1d0] sm:$0xff]
        %v430 = vld [vmem:[%s358 + $0x1d8] sm:$0xff]
        %v431 = vld [vmem:[%s358 + $0x1e0] sm:$0xff]
        %v432 = vld [vmem:[%s358 + $0x1e8] sm:$0xff]
        %v433 = vld [vmem:[%s358 + $0x1f0] sm:$0xff]
        %v434 = vld [vmem:[%s358 + $0x1f8] sm:$0xff]
        %v435 = vld [vmem:[%s368] sm:$0xff]
        %v436 = vld [vmem:[%s368 + $0x8] sm:$0xff]
        %v437 = vld [vmem:[%s368 + $0x10] sm:$0xff]
        %v438 = vld [vmem:[%s368 + $0x18] sm:$0xff]
        %v439 = vld [vmem:[%s368 + $0x20] sm:$0xff]
        %v440 = vld [vmem:[%s368 + $0x28] sm:$0xff]
        %v441 = vld [vmem:[%s368 + $0x30] sm:$0xff]
        %v442 = vld [vmem:[%s368 + $0x38] sm:$0xff]
        %v443 = vld [vmem:[%s368 + $0x40] sm:$0xff]
        %v444 = vld [vmem:[%s368 + $0x48] sm:$0xff]
        %v445 = vld [vmem:[%s368 + $0x50] sm:$0xff]
        %v446 = vld [vmem:[%s368 + $0x58] sm:$0xff]
        %v447 = vld [vmem:[%s368 + $0x60] sm:$0xff]
        %v448 = vld [vmem:[%s368 + $0x68] sm:$0xff]
        %v449 = vld [vmem:[%s368 + $0x70] sm:$0xff]
        %v450 = vld [vmem:[%s368 + $0x78] sm:$0xff]
        %v451 = vld [vmem:[%s368 + $0x80] sm:$0xff]
        %v452 = vld [vmem:[%s368 + $0x88] sm:$0xff]
        %v453 = vld [vmem:[%s368 + $0x90] sm:$0xff]
        %v454 = vld [vmem:[%s368 + $0x98] sm:$0xff]
        %v455 = vld [vmem:[%s368 + $0xa0] sm:$0xff]
        %v456 = vld [vmem:[%s368 + $0xa8] sm:$0xff]
        %v457 = vld [vmem:[%s368 + $0xb0] sm:$0xff]
        %v458 = vld [vmem:[%s368 + $0xb8] sm:$0xff]
        %v459 = vld [vmem:[%s368 + $0xc0] sm:$0xff]
        %v460 = vld [vmem:[%s368 + $0xc8] sm:$0xff]
        %v461 = vld [vmem:[%s368 + $0xd0] sm:$0xff]
        %v462 = vld [vmem:[%s368 + $0xd8] sm:$0xff]
        %v463 = vld [vmem:[%s368 + $0xe0] sm:$0xff]
        %v464 = vld [vmem:[%s368 + $0xe8] sm:$0xff]
        %v465 = vld [vmem:[%s368 + $0xf0] sm:$0xff]
        %v466 = vld [vmem:[%s368 + $0xf8] sm:$0xff]
        %v467 = vld [vmem:[%s368 + $0x100] sm:$0xff]
        %v468 = vld [vmem:[%s368 + $0x108] sm:$0xff]
        %v469 = vld [vmem:[%s368 + $0x110] sm:$0xff]
        %v470 = vld [vmem:[%s368 + $0x118] sm:$0xff]
        %v471 = vld [vmem:[%s368 + $0x120] sm:$0xff]
        %v472 = vld [vmem:[%s368 + $0x128] sm:$0xff]
        %v473 = vld [vmem:[%s368 + $0x130] sm:$0xff]
        %v474 = vld [vmem:[%s368 + $0x138] sm:$0xff]
        %v475 = vld [vmem:[%s368 + $0x140] sm:$0xff]
        %v476 = vld [vmem:[%s368 + $0x148] sm:$0xff]
        %v477 = vld [vmem:[%s368 + $0x150] sm:$0xff]
        %v478 = vld [vmem:[%s368 + $0x158] sm:$0xff]
        %v479 = vld [vmem:[%s368 + $0x160] sm:$0xff]
        %v480 = vld [vmem:[%s368 + $0x168] sm:$0xff]
        %v481 = vld [vmem:[%s368 + $0x170] sm:$0xff]
        %v482 = vld [vmem:[%s368 + $0x178] sm:$0xff]
        %v483 = vld [vmem:[%s368 + $0x180] sm:$0xff]
        %v484 = vld [vmem:[%s368 + $0x188] sm:$0xff]
        %v485 = vld [vmem:[%s368 + $0x190] sm:$0xff]
        %v486 = vld [vmem:[%s368 + $0x198] sm:$0xff]
        %v487 = vld [vmem:[%s368 + $0x1a0] sm:$0xff]
        %v488 = vld [vmem:[%s368 + $0x1a8] sm:$0xff]
        %v489 = vld [vmem:[%s368 + $0x1b0] sm:$0xff]
        %v490 = vld [vmem:[%s368 + $0x1b8] sm:$0xff]
        %v491 = vld [vmem:[%s368 + $0x1c0] sm:$0xff]
        %v492 = vld [vmem:[%s368 + $0x1c8] sm:$0xff]
        %v493 = vld [vmem:[%s368 + $0x1d0] sm:$0xff]
        %v494 = vld [vmem:[%s368 + $0x1d8] sm:$0xff]
        %v495 = vld [vmem:[%s368 + $0x1e0] sm:$0xff]
        %v496 = vld [vmem:[%s368 + $0x1e8] sm:$0xff]
        %v497 = vld [vmem:[%s368 + $0x1f0] sm:$0xff]
        %v498 = vld [vmem:[%s368 + $0x1f8] sm:$0xff]
        %v499 = vld [vmem:[%s2] sm:$0x7]
        %501 = vset.pattern.permute.xlu0 0
        %502 = vperm.xlu0 %501, %v371
        %v503 = vpop.permute.xlu0 %502
        %506 = vset.pattern.permute.xlu0 0
        %507 = vperm.xlu0 %506, %v372
        %v508 = vpop.permute.xlu0 %507
        %511 = vset.pattern.permute.xlu0 0
        %512 = vperm.xlu0 %511, %v373
        %v513 = vpop.permute.xlu0 %512
        %516 = vset.pattern.permute.xlu0 0
        %517 = vperm.xlu0 %516, %v374
        %v518 = vpop.permute.xlu0 %517
        %521 = vset.pattern.permute.xlu0 0
        %522 = vperm.xlu0 %521, %v375
        %v523 = vpop.permute.xlu0 %522
        %526 = vset.pattern.permute.xlu0 0
        %527 = vperm.xlu0 %526, %v376
        %v528 = vpop.permute.xlu0 %527
        %531 = vset.pattern.permute.xlu0 0
        %532 = vperm.xlu0 %531, %v377
        %v533 = vpop.permute.xlu0 %532
        %536 = vset.pattern.permute.xlu0 0
        %537 = vperm.xlu0 %536, %v378
        %v538 = vpop.permute.xlu0 %537
        %541 = vset.pattern.permute.xlu0 0
        %542 = vperm.xlu0 %541, %v379
        %v543 = vpop.permute.xlu0 %542
        %546 = vset.pattern.permute.xlu0 0
        %547 = vperm.xlu0 %546, %v380
        %v548 = vpop.permute.xlu0 %547
        %551 = vset.pattern.permute.xlu0 0
        %552 = vperm.xlu0 %551, %v381
        %v553 = vpop.permute.xlu0 %552
        %556 = vset.pattern.permute.xlu0 0
        %557 = vperm.xlu0 %556, %v382
        %v558 = vpop.permute.xlu0 %557
        %561 = vset.pattern.permute.xlu0 0
        %562 = vperm.xlu0 %561, %v383
        %v563 = vpop.permute.xlu0 %562
        %566 = vset.pattern.permute.xlu0 0
        %567 = vperm.xlu0 %566, %v384
        %v568 = vpop.permute.xlu0 %567
        %571 = vset.pattern.permute.xlu0 0
        %572 = vperm.xlu0 %571, %v385
        %v573 = vpop.permute.xlu0 %572
        %576 = vset.pattern.permute.xlu0 0
        %577 = vperm.xlu0 %576, %v386
        %v578 = vpop.permute.xlu0 %577
        %581 = vset.pattern.permute.xlu0 0
        %582 = vperm.xlu0 %581, %v387
        %v583 = vpop.permute.xlu0 %582
        %586 = vset.pattern.permute.xlu0 0
        %587 = vperm.xlu0 %586, %v388
        %v588 = vpop.permute.xlu0 %587
        %591 = vset.pattern.permute.xlu0 0
        %592 = vperm.xlu0 %591, %v389
        %v593 = vpop.permute.xlu0 %592
        %596 = vset.pattern.permute.xlu0 0
        %597 = vperm.xlu0 %596, %v390
        %v598 = vpop.permute.xlu0 %597
        %601 = vset.pattern.permute.xlu0 0
        %602 = vperm.xlu0 %601, %v391
        %v603 = vpop.permute.xlu0 %602
        %606 = vset.pattern.permute.xlu0 0
        %607 = vperm.xlu0 %606, %v392
        %v608 = vpop.permute.xlu0 %607
        %611 = vset.pattern.permute.xlu0 0
        %612 = vperm.xlu0 %611, %v393
        %v613 = vpop.permute.xlu0 %612
        %616 = vset.pattern.permute.xlu0 0
        %617 = vperm.xlu0 %616, %v394
        %v618 = vpop.permute.xlu0 %617
        %621 = vset.pattern.permute.xlu0 0
        %622 = vperm.xlu0 %621, %v395
        %v623 = vpop.permute.xlu0 %622
        %626 = vset.pattern.permute.xlu0 0
        %627 = vperm.xlu0 %626, %v396
        %v628 = vpop.permute.xlu0 %627
        %631 = vset.pattern.permute.xlu0 0
        %632 = vperm.xlu0 %631, %v397
        %v633 = vpop.permute.xlu0 %632
        %636 = vset.pattern.permute.xlu0 0
        %637 = vperm.xlu0 %636, %v398
        %v638 = vpop.permute.xlu0 %637
        %641 = vset.pattern.permute.xlu0 0
        %642 = vperm.xlu0 %641, %v399
        %v643 = vpop.permute.xlu0 %642
        %646 = vset.pattern.permute.xlu0 0
        %647 = vperm.xlu0 %646, %v400
        %v648 = vpop.permute.xlu0 %647
        %651 = vset.pattern.permute.xlu0 0
        %652 = vperm.xlu0 %651, %v401
        %v653 = vpop.permute.xlu0 %652
        %656 = vset.pattern.permute.xlu0 0
        %657 = vperm.xlu0 %656, %v402
        %v658 = vpop.permute.xlu0 %657
        %661 = vset.pattern.permute.xlu0 0
        %662 = vperm.xlu0 %661, %v403
        %v663 = vpop.permute.xlu0 %662
        %666 = vset.pattern.permute.xlu0 0
        %667 = vperm.xlu0 %666, %v404
        %v668 = vpop.permute.xlu0 %667
        %671 = vset.pattern.permute.xlu0 0
        %672 = vperm.xlu0 %671, %v405
        %v673 = vpop.permute.xlu0 %672
        %676 = vset.pattern.permute.xlu0 0
        %677 = vperm.xlu0 %676, %v406
        %v678 = vpop.permute.xlu0 %677
        %681 = vset.pattern.permute.xlu0 0
        %682 = vperm.xlu0 %681, %v407
        %v683 = vpop.permute.xlu0 %682
        %686 = vset.pattern.permute.xlu0 0
        %687 = vperm.xlu0 %686, %v408
        %v688 = vpop.permute.xlu0 %687
        %691 = vset.pattern.permute.xlu0 0
        %692 = vperm.xlu0 %691, %v409
        %v693 = vpop.permute.xlu0 %692
        %696 = vset.pattern.permute.xlu0 0
        %697 = vperm.xlu0 %696, %v410
        %v698 = vpop.permute.xlu0 %697
        %701 = vset.pattern.permute.xlu0 0
        %702 = vperm.xlu0 %701, %v411
        %v703 = vpop.permute.xlu0 %702
        %706 = vset.pattern.permute.xlu0 0
        %707 = vperm.xlu0 %706, %v412
        %v708 = vpop.permute.xlu0 %707
        %711 = vset.pattern.permute.xlu0 0
        %712 = vperm.xlu0 %711, %v413
        %v713 = vpop.permute.xlu0 %712
        %716 = vset.pattern.permute.xlu0 0
        %717 = vperm.xlu0 %716, %v414
        %v718 = vpop.permute.xlu0 %717
        %721 = vset.pattern.permute.xlu0 0
        %722 = vperm.xlu0 %721, %v415
        %v723 = vpop.permute.xlu0 %722
        %726 = vset.pattern.permute.xlu0 0
        %727 = vperm.xlu0 %726, %v416
        %v728 = vpop.permute.xlu0 %727
        %731 = vset.pattern.permute.xlu0 0
        %732 = vperm.xlu0 %731, %v417
        %v733 = vpop.permute.xlu0 %732
        %736 = vset.pattern.permute.xlu0 0
        %737 = vperm.xlu0 %736, %v418
        %v738 = vpop.permute.xlu0 %737
        %741 = vset.pattern.permute.xlu0 0
        %742 = vperm.xlu0 %741, %v419
        %v743 = vpop.permute.xlu0 %742
        %746 = vset.pattern.permute.xlu0 0
        %747 = vperm.xlu0 %746, %v420
        %v748 = vpop.permute.xlu0 %747
        %751 = vset.pattern.permute.xlu0 0
        %752 = vperm.xlu0 %751, %v421
        %v753 = vpop.permute.xlu0 %752
        %756 = vset.pattern.permute.xlu0 0
        %757 = vperm.xlu0 %756, %v422
        %v758 = vpop.permute.xlu0 %757
        %761 = vset.pattern.permute.xlu0 0
        %762 = vperm.xlu0 %761, %v423
        %v763 = vpop.permute.xlu0 %762
        %766 = vset.pattern.permute.xlu0 0
        %767 = vperm.xlu0 %766, %v424
        %v768 = vpop.permute.xlu0 %767
        %771 = vset.pattern.permute.xlu0 0
        %772 = vperm.xlu0 %771, %v425
        %v773 = vpop.permute.xlu0 %772
        %776 = vset.pattern.permute.xlu0 0
        %777 = vperm.xlu0 %776, %v426
        %v778 = vpop.permute.xlu0 %777
        %781 = vset.pattern.permute.xlu0 0
        %782 = vperm.xlu0 %781, %v427
        %v783 = vpop.permute.xlu0 %782
        %786 = vset.pattern.permute.xlu0 0
        %787 = vperm.xlu0 %786, %v428
        %v788 = vpop.permute.xlu0 %787
        %791 = vset.pattern.permute.xlu0 0
        %792 = vperm.xlu0 %791, %v429
        %v793 = vpop.permute.xlu0 %792
        %796 = vset.pattern.permute.xlu0 0
        %797 = vperm.xlu0 %796, %v430
        %v798 = vpop.permute.xlu0 %797
        %801 = vset.pattern.permute.xlu0 0
        %802 = vperm.xlu0 %801, %v431
        %v803 = vpop.permute.xlu0 %802
        %806 = vset.pattern.permute.xlu0 0
        %807 = vperm.xlu0 %806, %v432
        %v808 = vpop.permute.xlu0 %807
        %811 = vset.pattern.permute.xlu0 0
        %812 = vperm.xlu0 %811, %v433
        %v813 = vpop.permute.xlu0 %812
        %816 = vset.pattern.permute.xlu0 0
        %817 = vperm.xlu0 %816, %v434
        %v818 = vpop.permute.xlu0 %817
        %v820 = vlaneseq
        %v821 = vshrl.u32 %v820, 7
        %v822 = vsub.s32 0, %v821
        %v823 = vrot.slane %v499, %v822
        %v824 = vmul.f32 %v503, %v823
        %v825 = vmul.f32 %v508, %v823
        %v826 = vmul.f32 %v513, %v823
        %v827 = vmul.f32 %v518, %v823
        %v828 = vmul.f32 %v523, %v823
        %v829 = vmul.f32 %v528, %v823
        %v830 = vmul.f32 %v533, %v823
        %v831 = vmul.f32 %v538, %v823
        %v832 = vmul.f32 %v543, %v823
        %v833 = vmul.f32 %v548, %v823
        %v834 = vmul.f32 %v553, %v823
        %v835 = vmul.f32 %v558, %v823
        %v836 = vmul.f32 %v563, %v823
        %v837 = vmul.f32 %v568, %v823
        %v838 = vmul.f32 %v573, %v823
        %v839 = vmul.f32 %v578, %v823
        %v840 = vmul.f32 %v583, %v823
        %v841 = vmul.f32 %v588, %v823
        %v842 = vmul.f32 %v593, %v823
        %v843 = vmul.f32 %v598, %v823
        %v844 = vmul.f32 %v603, %v823
        %v845 = vmul.f32 %v608, %v823
        %v846 = vmul.f32 %v613, %v823
        %v847 = vmul.f32 %v618, %v823
        %v848 = vmul.f32 %v623, %v823
        %v849 = vmul.f32 %v628, %v823
        %v850 = vmul.f32 %v633, %v823
        %v851 = vmul.f32 %v638, %v823
        %v852 = vmul.f32 %v643, %v823
        %v853 = vmul.f32 %v648, %v823
        %v854 = vmul.f32 %v653, %v823
        %v855 = vmul.f32 %v658, %v823
        %v856 = vmul.f32 %v663, %v823
        %v857 = vmul.f32 %v668, %v823
        %v858 = vmul.f32 %v673, %v823
        %v859 = vmul.f32 %v678, %v823
        %v860 = vmul.f32 %v683, %v823
        %v861 = vmul.f32 %v688, %v823
        %v862 = vmul.f32 %v693, %v823
        %v863 = vmul.f32 %v698, %v823
        %v864 = vmul.f32 %v703, %v823
        %v865 = vmul.f32 %v708, %v823
        %v866 = vmul.f32 %v713, %v823
        %v867 = vmul.f32 %v718, %v823
        %v868 = vmul.f32 %v723, %v823
        %v869 = vmul.f32 %v728, %v823
        %v870 = vmul.f32 %v733, %v823
        %v871 = vmul.f32 %v738, %v823
        %v872 = vmul.f32 %v743, %v823
        %v873 = vmul.f32 %v748, %v823
        %v874 = vmul.f32 %v753, %v823
        %v875 = vmul.f32 %v758, %v823
        %v876 = vmul.f32 %v763, %v823
        %v877 = vmul.f32 %v768, %v823
        %v878 = vmul.f32 %v773, %v823
        %v879 = vmul.f32 %v778, %v823
        %v880 = vmul.f32 %v783, %v823
        %v881 = vmul.f32 %v788, %v823
        %v882 = vmul.f32 %v793, %v823
        %v883 = vmul.f32 %v798, %v823
        %v884 = vmul.f32 %v803, %v823
        %v885 = vmul.f32 %v808, %v823
        %v886 = vmul.f32 %v813, %v823
        %v887 = vmul.f32 %v818, %v823
        %888 = vset.pattern.permute.xlu0 1
        %889 = vperm.xlu0 %888, %v371
        %v890 = vpop.permute.xlu0 %889
        %892 = vset.pattern.permute.xlu0 1
        %893 = vperm.xlu0 %892, %v372
        %v894 = vpop.permute.xlu0 %893
        %896 = vset.pattern.permute.xlu0 1
        %897 = vperm.xlu0 %896, %v373
        %v898 = vpop.permute.xlu0 %897
        %900 = vset.pattern.permute.xlu0 1
        %901 = vperm.xlu0 %900, %v374
        %v902 = vpop.permute.xlu0 %901
        %904 = vset.pattern.permute.xlu0 1
        %905 = vperm.xlu0 %904, %v375
        %v906 = vpop.permute.xlu0 %905
        %908 = vset.pattern.permute.xlu0 1
        %909 = vperm.xlu0 %908, %v376
        %v910 = vpop.permute.xlu0 %909
        %912 = vset.pattern.permute.xlu0 1
        %913 = vperm.xlu0 %912, %v377
        %v914 = vpop.permute.xlu0 %913
        %916 = vset.pattern.permute.xlu0 1
        %917 = vperm.xlu0 %916, %v378
        %v918 = vpop.permute.xlu0 %917
        %920 = vset.pattern.permute.xlu0 1
        %921 = vperm.xlu0 %920, %v379
        %v922 = vpop.permute.xlu0 %921
        %924 = vset.pattern.permute.xlu0 1
        %925 = vperm.xlu0 %924, %v380
        %v926 = vpop.permute.xlu0 %925
        %928 = vset.pattern.permute.xlu0 1
        %929 = vperm.xlu0 %928, %v381
        %v930 = vpop.permute.xlu0 %929
        %932 = vset.pattern.permute.xlu0 1
        %933 = vperm.xlu0 %932, %v382
        %v934 = vpop.permute.xlu0 %933
        %936 = vset.pattern.permute.xlu0 1
        %937 = vperm.xlu0 %936, %v383
        %v938 = vpop.permute.xlu0 %937
        %940 = vset.pattern.permute.xlu0 1
        %941 = vperm.xlu0 %940, %v384
        %v942 = vpop.permute.xlu0 %941
        %944 = vset.pattern.permute.xlu0 1
        %945 = vperm.xlu0 %944, %v385
        %v946 = vpop.permute.xlu0 %945
        %948 = vset.pattern.permute.xlu0 1
        %949 = vperm.xlu0 %948, %v386
        %v950 = vpop.permute.xlu0 %949
        %952 = vset.pattern.permute.xlu0 1
        %953 = vperm.xlu0 %952, %v387
        %v954 = vpop.permute.xlu0 %953
        %956 = vset.pattern.permute.xlu0 1
        %957 = vperm.xlu0 %956, %v388
        %v958 = vpop.permute.xlu0 %957
        %960 = vset.pattern.permute.xlu0 1
        %961 = vperm.xlu0 %960, %v389
        %v962 = vpop.permute.xlu0 %961
        %964 = vset.pattern.permute.xlu0 1
        %965 = vperm.xlu0 %964, %v390
        %v966 = vpop.permute.xlu0 %965
        %968 = vset.pattern.permute.xlu0 1
        %969 = vperm.xlu0 %968, %v391
        %v970 = vpop.permute.xlu0 %969
        %972 = vset.pattern.permute.xlu0 1
        %973 = vperm.xlu0 %972, %v392
        %v974 = vpop.permute.xlu0 %973
        %976 = vset.pattern.permute.xlu0 1
        %977 = vperm.xlu0 %976, %v393
        %v978 = vpop.permute.xlu0 %977
        %980 = vset.pattern.permute.xlu0 1
        %981 = vperm.xlu0 %980, %v394
        %v982 = vpop.permute.xlu0 %981
        %984 = vset.pattern.permute.xlu0 1
        %985 = vperm.xlu0 %984, %v395
        %v986 = vpop.permute.xlu0 %985
        %988 = vset.pattern.permute.xlu0 1
        %989 = vperm.xlu0 %988, %v396
        %v990 = vpop.permute.xlu0 %989
        %992 = vset.pattern.permute.xlu0 1
        %993 = vperm.xlu0 %992, %v397
        %v994 = vpop.permute.xlu0 %993
        %996 = vset.pattern.permute.xlu0 1
        %997 = vperm.xlu0 %996, %v398
        %v998 = vpop.permute.xlu0 %997
        %1000 = vset.pattern.permute.xlu0 1
        %1001 = vperm.xlu0 %1000, %v399
        %v1002 = vpop.permute.xlu0 %1001
        %1004 = vset.pattern.permute.xlu0 1
        %1005 = vperm.xlu0 %1004, %v400
        %v1006 = vpop.permute.xlu0 %1005
        %1008 = vset.pattern.permute.xlu0 1
        %1009 = vperm.xlu0 %1008, %v401
        %v1010 = vpop.permute.xlu0 %1009
        %1012 = vset.pattern.permute.xlu0 1
        %1013 = vperm.xlu0 %1012, %v402
        %v1014 = vpop.permute.xlu0 %1013
        %1016 = vset.pattern.permute.xlu0 1
        %1017 = vperm.xlu0 %1016, %v403
        %v1018 = vpop.permute.xlu0 %1017
        %1020 = vset.pattern.permute.xlu0 1
        %1021 = vperm.xlu0 %1020, %v404
        %v1022 = vpop.permute.xlu0 %1021
        %1024 = vset.pattern.permute.xlu0 1
        %1025 = vperm.xlu0 %1024, %v405
        %v1026 = vpop.permute.xlu0 %1025
        %1028 = vset.pattern.permute.xlu0 1
        %1029 = vperm.xlu0 %1028, %v406
        %v1030 = vpop.permute.xlu0 %1029
        %1032 = vset.pattern.permute.xlu0 1
        %1033 = vperm.xlu0 %1032, %v407
        %v1034 = vpop.permute.xlu0 %1033
        %1036 = vset.pattern.permute.xlu0 1
        %1037 = vperm.xlu0 %1036, %v408
        %v1038 = vpop.permute.xlu0 %1037
        %1040 = vset.pattern.permute.xlu0 1
        %1041 = vperm.xlu0 %1040, %v409
        %v1042 = vpop.permute.xlu0 %1041
        %1044 = vset.pattern.permute.xlu0 1
        %1045 = vperm.xlu0 %1044, %v410
        %v1046 = vpop.permute.xlu0 %1045
        %1048 = vset.pattern.permute.xlu0 1
        %1049 = vperm.xlu0 %1048, %v411
        %v1050 = vpop.permute.xlu0 %1049
        %1052 = vset.pattern.permute.xlu0 1
        %1053 = vperm.xlu0 %1052, %v412
        %v1054 = vpop.permute.xlu0 %1053
        %1056 = vset.pattern.permute.xlu0 1
        %1057 = vperm.xlu0 %1056, %v413
        %v1058 = vpop.permute.xlu0 %1057
        %1060 = vset.pattern.permute.xlu0 1
        %1061 = vperm.xlu0 %1060, %v414
        %v1062 = vpop.permute.xlu0 %1061
        %1064 = vset.pattern.permute.xlu0 1
        %1065 = vperm.xlu0 %1064, %v415
        %v1066 = vpop.permute.xlu0 %1065
        %1068 = vset.pattern.permute.xlu0 1
        %1069 = vperm.xlu0 %1068, %v416
        %v1070 = vpop.permute.xlu0 %1069
        %1072 = vset.pattern.permute.xlu0 1
        %1073 = vperm.xlu0 %1072, %v417
        %v1074 = vpop.permute.xlu0 %1073
        %1076 = vset.pattern.permute.xlu0 1
        %1077 = vperm.xlu0 %1076, %v418
        %v1078 = vpop.permute.xlu0 %1077
        %1080 = vset.pattern.permute.xlu0 1
        %1081 = vperm.xlu0 %1080, %v419
        %v1082 = vpop.permute.xlu0 %1081
        %1084 = vset.pattern.permute.xlu0 1
        %1085 = vperm.xlu0 %1084, %v420
        %v1086 = vpop.permute.xlu0 %1085
        %1088 = vset.pattern.permute.xlu0 1
        %1089 = vperm.xlu0 %1088, %v421
        %v1090 = vpop.permute.xlu0 %1089
        %1092 = vset.pattern.permute.xlu0 1
        %1093 = vperm.xlu0 %1092, %v422
        %v1094 = vpop.permute.xlu0 %1093
        %1096 = vset.pattern.permute.xlu0 1
        %1097 = vperm.xlu0 %1096, %v423
        %v1098 = vpop.permute.xlu0 %1097
        %1100 = vset.pattern.permute.xlu0 1
        %1101 = vperm.xlu0 %1100, %v424
        %v1102 = vpop.permute.xlu0 %1101
        %1104 = vset.pattern.permute.xlu0 1
        %1105 = vperm.xlu0 %1104, %v425
        %v1106 = vpop.permute.xlu0 %1105
        %1108 = vset.pattern.permute.xlu0 1
        %1109 = vperm.xlu0 %1108, %v426
        %v1110 = vpop.permute.xlu0 %1109
        %1112 = vset.pattern.permute.xlu0 1
        %1113 = vperm.xlu0 %1112, %v427
        %v1114 = vpop.permute.xlu0 %1113
        %1116 = vset.pattern.permute.xlu0 1
        %1117 = vperm.xlu0 %1116, %v428
        %v1118 = vpop.permute.xlu0 %1117
        %1120 = vset.pattern.permute.xlu0 1
        %1121 = vperm.xlu0 %1120, %v429
        %v1122 = vpop.permute.xlu0 %1121
        %1124 = vset.pattern.permute.xlu0 1
        %1125 = vperm.xlu0 %1124, %v430
        %v1126 = vpop.permute.xlu0 %1125
        %1128 = vset.pattern.permute.xlu0 1
        %1129 = vperm.xlu0 %1128, %v431
        %v1130 = vpop.permute.xlu0 %1129
        %1132 = vset.pattern.permute.xlu0 1
        %1133 = vperm.xlu0 %1132, %v432
        %v1134 = vpop.permute.xlu0 %1133
        %1136 = vset.pattern.permute.xlu0 1
        %1137 = vperm.xlu0 %1136, %v433
        %v1138 = vpop.permute.xlu0 %1137
        %1140 = vset.pattern.permute.xlu0 1
        %1141 = vperm.xlu0 %1140, %v434
        %v1142 = vpop.permute.xlu0 %1141
        %v1144 = vlaneseq
        %v1145 = vshrl.u32 %v1144, 7
        %v1146 = vsub.s32 1, %v1145
        %v1147 = vrot.slane %v499, %v1146
        %v1148 = vmul.f32 %v890, %v1147
        %v1149 = vmul.f32 %v894, %v1147
        %v1150 = vmul.f32 %v898, %v1147
        %v1151 = vmul.f32 %v902, %v1147
        %v1152 = vmul.f32 %v906, %v1147
        %v1153 = vmul.f32 %v910, %v1147
        %v1154 = vmul.f32 %v914, %v1147
        %v1155 = vmul.f32 %v918, %v1147
        %v1156 = vmul.f32 %v922, %v1147
        %v1157 = vmul.f32 %v926, %v1147
        %v1158 = vmul.f32 %v930, %v1147
        %v1159 = vmul.f32 %v934, %v1147
        %v1160 = vmul.f32 %v938, %v1147
        %v1161 = vmul.f32 %v942, %v1147
        %v1162 = vmul.f32 %v946, %v1147
        %v1163 = vmul.f32 %v950, %v1147
        %v1164 = vmul.f32 %v954, %v1147
        %v1165 = vmul.f32 %v958, %v1147
        %v1166 = vmul.f32 %v962, %v1147
        %v1167 = vmul.f32 %v966, %v1147
        %v1168 = vmul.f32 %v970, %v1147
        %v1169 = vmul.f32 %v974, %v1147
        %v1170 = vmul.f32 %v978, %v1147
        %v1171 = vmul.f32 %v982, %v1147
        %v1172 = vmul.f32 %v986, %v1147
        %v1173 = vmul.f32 %v990, %v1147
        %v1174 = vmul.f32 %v994, %v1147
        %v1175 = vmul.f32 %v998, %v1147
        %v1176 = vmul.f32 %v1002, %v1147
        %v1177 = vmul.f32 %v1006, %v1147
        %v1178 = vmul.f32 %v1010, %v1147
        %v1179 = vmul.f32 %v1014, %v1147
        %v1180 = vmul.f32 %v1018, %v1147
        %v1181 = vmul.f32 %v1022, %v1147
        %v1182 = vmul.f32 %v1026, %v1147
        %v1183 = vmul.f32 %v1030, %v1147
        %v1184 = vmul.f32 %v1034, %v1147
        %v1185 = vmul.f32 %v1038, %v1147
        %v1186 = vmul.f32 %v1042, %v1147
        %v1187 = vmul.f32 %v1046, %v1147
        %v1188 = vmul.f32 %v1050, %v1147
        %v1189 = vmul.f32 %v1054, %v1147
        %v1190 = vmul.f32 %v1058, %v1147
        %v1191 = vmul.f32 %v1062, %v1147
        %v1192 = vmul.f32 %v1066, %v1147
        %v1193 = vmul.f32 %v1070, %v1147
        %v1194 = vmul.f32 %v1074, %v1147
        %v1195 = vmul.f32 %v1078, %v1147
        %v1196 = vmul.f32 %v1082, %v1147
        %v1197 = vmul.f32 %v1086, %v1147
        %v1198 = vmul.f32 %v1090, %v1147
        %v1199 = vmul.f32 %v1094, %v1147
        %v1200 = vmul.f32 %v1098, %v1147
        %v1201 = vmul.f32 %v1102, %v1147
        %v1202 = vmul.f32 %v1106, %v1147
        %v1203 = vmul.f32 %v1110, %v1147
        %v1204 = vmul.f32 %v1114, %v1147
        %v1205 = vmul.f32 %v1118, %v1147
        %v1206 = vmul.f32 %v1122, %v1147
        %v1207 = vmul.f32 %v1126, %v1147
        %v1208 = vmul.f32 %v1130, %v1147
        %v1209 = vmul.f32 %v1134, %v1147
        %v1210 = vmul.f32 %v1138, %v1147
        %v1211 = vmul.f32 %v1142, %v1147
        %v1212 = vadd.f32 %v824, %v1148
        %v1213 = vadd.f32 %v825, %v1149
        %v1214 = vadd.f32 %v826, %v1150
        %v1215 = vadd.f32 %v827, %v1151
        %v1216 = vadd.f32 %v828, %v1152
        %v1217 = vadd.f32 %v829, %v1153
        %v1218 = vadd.f32 %v830, %v1154
        %v1219 = vadd.f32 %v831, %v1155
        %v1220 = vadd.f32 %v832, %v1156
        %v1221 = vadd.f32 %v833, %v1157
        %v1222 = vadd.f32 %v834, %v1158
        %v1223 = vadd.f32 %v835, %v1159
        %v1224 = vadd.f32 %v836, %v1160
        %v1225 = vadd.f32 %v837, %v1161
        %v1226 = vadd.f32 %v838, %v1162
        %v1227 = vadd.f32 %v839, %v1163
        %v1228 = vadd.f32 %v840, %v1164
        %v1229 = vadd.f32 %v841, %v1165
        %v1230 = vadd.f32 %v842, %v1166
        %v1231 = vadd.f32 %v843, %v1167
        %v1232 = vadd.f32 %v844, %v1168
        %v1233 = vadd.f32 %v845, %v1169
        %v1234 = vadd.f32 %v846, %v1170
        %v1235 = vadd.f32 %v847, %v1171
        %v1236 = vadd.f32 %v848, %v1172
        %v1237 = vadd.f32 %v849, %v1173
        %v1238 = vadd.f32 %v850, %v1174
        %v1239 = vadd.f32 %v851, %v1175
        %v1240 = vadd.f32 %v852, %v1176
        %v1241 = vadd.f32 %v853, %v1177
        %v1242 = vadd.f32 %v854, %v1178
        %v1243 = vadd.f32 %v855, %v1179
        %v1244 = vadd.f32 %v856, %v1180
        %v1245 = vadd.f32 %v857, %v1181
        %v1246 = vadd.f32 %v858, %v1182
        %v1247 = vadd.f32 %v859, %v1183
        %v1248 = vadd.f32 %v860, %v1184
        %v1249 = vadd.f32 %v861, %v1185
        %v1250 = vadd.f32 %v862, %v1186
        %v1251 = vadd.f32 %v863, %v1187
        %v1252 = vadd.f32 %v864, %v1188
        %v1253 = vadd.f32 %v865, %v1189
        %v1254 = vadd.f32 %v866, %v1190
        %v1255 = vadd.f32 %v867, %v1191
        %v1256 = vadd.f32 %v868, %v1192
        %v1257 = vadd.f32 %v869, %v1193
        %v1258 = vadd.f32 %v870, %v1194
        %v1259 = vadd.f32 %v871, %v1195
        %v1260 = vadd.f32 %v872, %v1196
        %v1261 = vadd.f32 %v873, %v1197
        %v1262 = vadd.f32 %v874, %v1198
        %v1263 = vadd.f32 %v875, %v1199
        %v1264 = vadd.f32 %v876, %v1200
        %v1265 = vadd.f32 %v877, %v1201
        %v1266 = vadd.f32 %v878, %v1202
        %v1267 = vadd.f32 %v879, %v1203
        %v1268 = vadd.f32 %v880, %v1204
        %v1269 = vadd.f32 %v881, %v1205
        %v1270 = vadd.f32 %v882, %v1206
        %v1271 = vadd.f32 %v883, %v1207
        %v1272 = vadd.f32 %v884, %v1208
        %v1273 = vadd.f32 %v885, %v1209
        %v1274 = vadd.f32 %v886, %v1210
        %v1275 = vadd.f32 %v887, %v1211
        %1277 = vset.pattern.permute.xlu0 0
        %1278 = vperm.xlu0 %1277, %v435
        %v1279 = vpop.permute.xlu0 %1278
        %1282 = vset.pattern.permute.xlu0 0
        %1283 = vperm.xlu0 %1282, %v436
        %v1284 = vpop.permute.xlu0 %1283
        %1287 = vset.pattern.permute.xlu0 0
        %1288 = vperm.xlu0 %1287, %v437
        %v1289 = vpop.permute.xlu0 %1288
        %1292 = vset.pattern.permute.xlu0 0
        %1293 = vperm.xlu0 %1292, %v438
        %v1294 = vpop.permute.xlu0 %1293
        %1297 = vset.pattern.permute.xlu0 0
        %1298 = vperm.xlu0 %1297, %v439
        %v1299 = vpop.permute.xlu0 %1298
        %1302 = vset.pattern.permute.xlu0 0
        %1303 = vperm.xlu0 %1302, %v440
        %v1304 = vpop.permute.xlu0 %1303
        %1307 = vset.pattern.permute.xlu0 0
        %1308 = vperm.xlu0 %1307, %v441
        %v1309 = vpop.permute.xlu0 %1308
        %1312 = vset.pattern.permute.xlu0 0
        %1313 = vperm.xlu0 %1312, %v442
        %v1314 = vpop.permute.xlu0 %1313
        %1317 = vset.pattern.permute.xlu0 0
        %1318 = vperm.xlu0 %1317, %v443
        %v1319 = vpop.permute.xlu0 %1318
        %1322 = vset.pattern.permute.xlu0 0
        %1323 = vperm.xlu0 %1322, %v444
        %v1324 = vpop.permute.xlu0 %1323
        %1327 = vset.pattern.permute.xlu0 0
        %1328 = vperm.xlu0 %1327, %v445
        %v1329 = vpop.permute.xlu0 %1328
        %1332 = vset.pattern.permute.xlu0 0
        %1333 = vperm.xlu0 %1332, %v446
        %v1334 = vpop.permute.xlu0 %1333
        %1337 = vset.pattern.permute.xlu0 0
        %1338 = vperm.xlu0 %1337, %v447
        %v1339 = vpop.permute.xlu0 %1338
        %1342 = vset.pattern.permute.xlu0 0
        %1343 = vperm.xlu0 %1342, %v448
        %v1344 = vpop.permute.xlu0 %1343
        %1347 = vset.pattern.permute.xlu0 0
        %1348 = vperm.xlu0 %1347, %v449
        %v1349 = vpop.permute.xlu0 %1348
        %1352 = vset.pattern.permute.xlu0 0
        %1353 = vperm.xlu0 %1352, %v450
        %v1354 = vpop.permute.xlu0 %1353
        %1357 = vset.pattern.permute.xlu0 0
        %1358 = vperm.xlu0 %1357, %v451
        %v1359 = vpop.permute.xlu0 %1358
        %1362 = vset.pattern.permute.xlu0 0
        %1363 = vperm.xlu0 %1362, %v452
        %v1364 = vpop.permute.xlu0 %1363
        %1367 = vset.pattern.permute.xlu0 0
        %1368 = vperm.xlu0 %1367, %v453
        %v1369 = vpop.permute.xlu0 %1368
        %1372 = vset.pattern.permute.xlu0 0
        %1373 = vperm.xlu0 %1372, %v454
        %v1374 = vpop.permute.xlu0 %1373
        %1377 = vset.pattern.permute.xlu0 0
        %1378 = vperm.xlu0 %1377, %v455
        %v1379 = vpop.permute.xlu0 %1378
        %1382 = vset.pattern.permute.xlu0 0
        %1383 = vperm.xlu0 %1382, %v456
        %v1384 = vpop.permute.xlu0 %1383
        %1387 = vset.pattern.permute.xlu0 0
        %1388 = vperm.xlu0 %1387, %v457
        %v1389 = vpop.permute.xlu0 %1388
        %1392 = vset.pattern.permute.xlu0 0
        %1393 = vperm.xlu0 %1392, %v458
        %v1394 = vpop.permute.xlu0 %1393
        %1397 = vset.pattern.permute.xlu0 0
        %1398 = vperm.xlu0 %1397, %v459
        %v1399 = vpop.permute.xlu0 %1398
        %1402 = vset.pattern.permute.xlu0 0
        %1403 = vperm.xlu0 %1402, %v460
        %v1404 = vpop.permute.xlu0 %1403
        %1407 = vset.pattern.permute.xlu0 0
        %1408 = vperm.xlu0 %1407, %v461
        %v1409 = vpop.permute.xlu0 %1408
        %1412 = vset.pattern.permute.xlu0 0
        %1413 = vperm.xlu0 %1412, %v462
        %v1414 = vpop.permute.xlu0 %1413
        %1417 = vset.pattern.permute.xlu0 0
        %1418 = vperm.xlu0 %1417, %v463
        %v1419 = vpop.permute.xlu0 %1418
        %1422 = vset.pattern.permute.xlu0 0
        %1423 = vperm.xlu0 %1422, %v464
        %v1424 = vpop.permute.xlu0 %1423
        %1427 = vset.pattern.permute.xlu0 0
        %1428 = vperm.xlu0 %1427, %v465
        %v1429 = vpop.permute.xlu0 %1428
        %1432 = vset.pattern.permute.xlu0 0
        %1433 = vperm.xlu0 %1432, %v466
        %v1434 = vpop.permute.xlu0 %1433
        %1437 = vset.pattern.permute.xlu0 0
        %1438 = vperm.xlu0 %1437, %v467
        %v1439 = vpop.permute.xlu0 %1438
        %1442 = vset.pattern.permute.xlu0 0
        %1443 = vperm.xlu0 %1442, %v468
        %v1444 = vpop.permute.xlu0 %1443
        %1447 = vset.pattern.permute.xlu0 0
        %1448 = vperm.xlu0 %1447, %v469
        %v1449 = vpop.permute.xlu0 %1448
        %1452 = vset.pattern.permute.xlu0 0
        %1453 = vperm.xlu0 %1452, %v470
        %v1454 = vpop.permute.xlu0 %1453
        %1457 = vset.pattern.permute.xlu0 0
        %1458 = vperm.xlu0 %1457, %v471
        %v1459 = vpop.permute.xlu0 %1458
        %1462 = vset.pattern.permute.xlu0 0
        %1463 = vperm.xlu0 %1462, %v472
        %v1464 = vpop.permute.xlu0 %1463
        %1467 = vset.pattern.permute.xlu0 0
        %1468 = vperm.xlu0 %1467, %v473
        %v1469 = vpop.permute.xlu0 %1468
        %1472 = vset.pattern.permute.xlu0 0
        %1473 = vperm.xlu0 %1472, %v474
        %v1474 = vpop.permute.xlu0 %1473
        %1477 = vset.pattern.permute.xlu0 0
        %1478 = vperm.xlu0 %1477, %v475
        %v1479 = vpop.permute.xlu0 %1478
        %1482 = vset.pattern.permute.xlu0 0
        %1483 = vperm.xlu0 %1482, %v476
        %v1484 = vpop.permute.xlu0 %1483
        %1487 = vset.pattern.permute.xlu0 0
        %1488 = vperm.xlu0 %1487, %v477
        %v1489 = vpop.permute.xlu0 %1488
        %1492 = vset.pattern.permute.xlu0 0
        %1493 = vperm.xlu0 %1492, %v478
        %v1494 = vpop.permute.xlu0 %1493
        %1497 = vset.pattern.permute.xlu0 0
        %1498 = vperm.xlu0 %1497, %v479
        %v1499 = vpop.permute.xlu0 %1498
        %1502 = vset.pattern.permute.xlu0 0
        %1503 = vperm.xlu0 %1502, %v480
        %v1504 = vpop.permute.xlu0 %1503
        %1507 = vset.pattern.permute.xlu0 0
        %1508 = vperm.xlu0 %1507, %v481
        %v1509 = vpop.permute.xlu0 %1508
        %1512 = vset.pattern.permute.xlu0 0
        %1513 = vperm.xlu0 %1512, %v482
        %v1514 = vpop.permute.xlu0 %1513
        %1517 = vset.pattern.permute.xlu0 0
        %1518 = vperm.xlu0 %1517, %v483
        %v1519 = vpop.permute.xlu0 %1518
        %1522 = vset.pattern.permute.xlu0 0
        %1523 = vperm.xlu0 %1522, %v484
        %v1524 = vpop.permute.xlu0 %1523
        %1527 = vset.pattern.permute.xlu0 0
        %1528 = vperm.xlu0 %1527, %v485
        %v1529 = vpop.permute.xlu0 %1528
        %1532 = vset.pattern.permute.xlu0 0
        %1533 = vperm.xlu0 %1532, %v486
        %v1534 = vpop.permute.xlu0 %1533
        %1537 = vset.pattern.permute.xlu0 0
        %1538 = vperm.xlu0 %1537, %v487
        %v1539 = vpop.permute.xlu0 %1538
        %1542 = vset.pattern.permute.xlu0 0
        %1543 = vperm.xlu0 %1542, %v488
        %v1544 = vpop.permute.xlu0 %1543
        %1547 = vset.pattern.permute.xlu0 0
        %1548 = vperm.xlu0 %1547, %v489
        %v1549 = vpop.permute.xlu0 %1548
        %1552 = vset.pattern.permute.xlu0 0
        %1553 = vperm.xlu0 %1552, %v490
        %v1554 = vpop.permute.xlu0 %1553
        %1557 = vset.pattern.permute.xlu0 0
        %1558 = vperm.xlu0 %1557, %v491
        %v1559 = vpop.permute.xlu0 %1558
        %1562 = vset.pattern.permute.xlu0 0
        %1563 = vperm.xlu0 %1562, %v492
        %v1564 = vpop.permute.xlu0 %1563
        %1567 = vset.pattern.permute.xlu0 0
        %1568 = vperm.xlu0 %1567, %v493
        %v1569 = vpop.permute.xlu0 %1568
        %1572 = vset.pattern.permute.xlu0 0
        %1573 = vperm.xlu0 %1572, %v494
        %v1574 = vpop.permute.xlu0 %1573
        %1577 = vset.pattern.permute.xlu0 0
        %1578 = vperm.xlu0 %1577, %v495
        %v1579 = vpop.permute.xlu0 %1578
        %1582 = vset.pattern.permute.xlu0 0
        %1583 = vperm.xlu0 %1582, %v496
        %v1584 = vpop.permute.xlu0 %1583
        %1587 = vset.pattern.permute.xlu0 0
        %1588 = vperm.xlu0 %1587, %v497
        %v1589 = vpop.permute.xlu0 %1588
        %1592 = vset.pattern.permute.xlu0 0
        %1593 = vperm.xlu0 %1592, %v498
        %v1594 = vpop.permute.xlu0 %1593
        %v1596 = vlaneseq
        %v1597 = vshrl.u32 %v1596, 7
        %v1598 = vsub.s32 2, %v1597
        %v1599 = vrot.slane %v499, %v1598
        %v1600 = vmul.f32 %v1279, %v1599
        %v1601 = vmul.f32 %v1284, %v1599
        %v1602 = vmul.f32 %v1289, %v1599
        %v1603 = vmul.f32 %v1294, %v1599
        %v1604 = vmul.f32 %v1299, %v1599
        %v1605 = vmul.f32 %v1304, %v1599
        %v1606 = vmul.f32 %v1309, %v1599
        %v1607 = vmul.f32 %v1314, %v1599
        %v1608 = vmul.f32 %v1319, %v1599
        %v1609 = vmul.f32 %v1324, %v1599
        %v1610 = vmul.f32 %v1329, %v1599
        %v1611 = vmul.f32 %v1334, %v1599
        %v1612 = vmul.f32 %v1339, %v1599
        %v1613 = vmul.f32 %v1344, %v1599
        %v1614 = vmul.f32 %v1349, %v1599
        %v1615 = vmul.f32 %v1354, %v1599
        %v1616 = vmul.f32 %v1359, %v1599
        %v1617 = vmul.f32 %v1364, %v1599
        %v1618 = vmul.f32 %v1369, %v1599
        %v1619 = vmul.f32 %v1374, %v1599
        %v1620 = vmul.f32 %v1379, %v1599
        %v1621 = vmul.f32 %v1384, %v1599
        %v1622 = vmul.f32 %v1389, %v1599
        %v1623 = vmul.f32 %v1394, %v1599
        %v1624 = vmul.f32 %v1399, %v1599
        %v1625 = vmul.f32 %v1404, %v1599
        %v1626 = vmul.f32 %v1409, %v1599
        %v1627 = vmul.f32 %v1414, %v1599
        %v1628 = vmul.f32 %v1419, %v1599
        %v1629 = vmul.f32 %v1424, %v1599
        %v1630 = vmul.f32 %v1429, %v1599
        %v1631 = vmul.f32 %v1434, %v1599
        %v1632 = vmul.f32 %v1439, %v1599
        %v1633 = vmul.f32 %v1444, %v1599
        %v1634 = vmul.f32 %v1449, %v1599
        %v1635 = vmul.f32 %v1454, %v1599
        %v1636 = vmul.f32 %v1459, %v1599
        %v1637 = vmul.f32 %v1464, %v1599
        %v1638 = vmul.f32 %v1469, %v1599
        %v1639 = vmul.f32 %v1474, %v1599
        %v1640 = vmul.f32 %v1479, %v1599
        %v1641 = vmul.f32 %v1484, %v1599
        %v1642 = vmul.f32 %v1489, %v1599
        %v1643 = vmul.f32 %v1494, %v1599
        %v1644 = vmul.f32 %v1499, %v1599
        %v1645 = vmul.f32 %v1504, %v1599
        %v1646 = vmul.f32 %v1509, %v1599
        %v1647 = vmul.f32 %v1514, %v1599
        %v1648 = vmul.f32 %v1519, %v1599
        %v1649 = vmul.f32 %v1524, %v1599
        %v1650 = vmul.f32 %v1529, %v1599
        %v1651 = vmul.f32 %v1534, %v1599
        %v1652 = vmul.f32 %v1539, %v1599
        %v1653 = vmul.f32 %v1544, %v1599
        %v1654 = vmul.f32 %v1549, %v1599
        %v1655 = vmul.f32 %v1554, %v1599
        %v1656 = vmul.f32 %v1559, %v1599
        %v1657 = vmul.f32 %v1564, %v1599
        %v1658 = vmul.f32 %v1569, %v1599
        %v1659 = vmul.f32 %v1574, %v1599
        %v1660 = vmul.f32 %v1579, %v1599
        %v1661 = vmul.f32 %v1584, %v1599
        %v1662 = vmul.f32 %v1589, %v1599
        %v1663 = vmul.f32 %v1594, %v1599
        %v1664 = vadd.f32 %v1212, %v1600
        %v1665 = vadd.f32 %v1213, %v1601
        %v1666 = vadd.f32 %v1214, %v1602
        %v1667 = vadd.f32 %v1215, %v1603
        %v1668 = vadd.f32 %v1216, %v1604
        %v1669 = vadd.f32 %v1217, %v1605
        %v1670 = vadd.f32 %v1218, %v1606
        %v1671 = vadd.f32 %v1219, %v1607
        %v1672 = vadd.f32 %v1220, %v1608
        %v1673 = vadd.f32 %v1221, %v1609
        %v1674 = vadd.f32 %v1222, %v1610
        %v1675 = vadd.f32 %v1223, %v1611
        %v1676 = vadd.f32 %v1224, %v1612
        %v1677 = vadd.f32 %v1225, %v1613
        %v1678 = vadd.f32 %v1226, %v1614
        %v1679 = vadd.f32 %v1227, %v1615
        %v1680 = vadd.f32 %v1228, %v1616
        %v1681 = vadd.f32 %v1229, %v1617
        %v1682 = vadd.f32 %v1230, %v1618
        %v1683 = vadd.f32 %v1231, %v1619
        %v1684 = vadd.f32 %v1232, %v1620
        %v1685 = vadd.f32 %v1233, %v1621
        %v1686 = vadd.f32 %v1234, %v1622
        %v1687 = vadd.f32 %v1235, %v1623
        %v1688 = vadd.f32 %v1236, %v1624
        %v1689 = vadd.f32 %v1237, %v1625
        %v1690 = vadd.f32 %v1238, %v1626
        %v1691 = vadd.f32 %v1239, %v1627
        %v1692 = vadd.f32 %v1240, %v1628
        %v1693 = vadd.f32 %v1241, %v1629
        %v1694 = vadd.f32 %v1242, %v1630
        %v1695 = vadd.f32 %v1243, %v1631
        %v1696 = vadd.f32 %v1244, %v1632
        %v1697 = vadd.f32 %v1245, %v1633
        %v1698 = vadd.f32 %v1246, %v1634
        %v1699 = vadd.f32 %v1247, %v1635
        %v1700 = vadd.f32 %v1248, %v1636
        %v1701 = vadd.f32 %v1249, %v1637
        %v1702 = vadd.f32 %v1250, %v1638
        %v1703 = vadd.f32 %v1251, %v1639
        %v1704 = vadd.f32 %v1252, %v1640
        %v1705 = vadd.f32 %v1253, %v1641
        %v1706 = vadd.f32 %v1254, %v1642
        %v1707 = vadd.f32 %v1255, %v1643
        %v1708 = vadd.f32 %v1256, %v1644
        %v1709 = vadd.f32 %v1257, %v1645
        %v1710 = vadd.f32 %v1258, %v1646
        %v1711 = vadd.f32 %v1259, %v1647
        %v1712 = vadd.f32 %v1260, %v1648
        %v1713 = vadd.f32 %v1261, %v1649
        %v1714 = vadd.f32 %v1262, %v1650
        %v1715 = vadd.f32 %v1263, %v1651
        %v1716 = vadd.f32 %v1264, %v1652
        %v1717 = vadd.f32 %v1265, %v1653
        %v1718 = vadd.f32 %v1266, %v1654
        %v1719 = vadd.f32 %v1267, %v1655
        %v1720 = vadd.f32 %v1268, %v1656
        %v1721 = vadd.f32 %v1269, %v1657
        %v1722 = vadd.f32 %v1270, %v1658
        %v1723 = vadd.f32 %v1271, %v1659
        %v1724 = vadd.f32 %v1272, %v1660
        %v1725 = vadd.f32 %v1273, %v1661
        %v1726 = vadd.f32 %v1274, %v1662
        %v1727 = vadd.f32 %v1275, %v1663
        %v1728 = vld [vmem:[%s3] sm:$0x1]
        %v1730 = vlaneseq
        %v1731 = vshrl.u32 %v1730, 7
        %v1732 = vsub.s32 0, %v1731
        %v1733 = vrot.slane %v1728, %v1732
        %v1735 = vadd.f32 %v1664, %v1733
        %v1736 = vadd.f32 %v1665, %v1733
        %v1737 = vadd.f32 %v1666, %v1733
        %v1738 = vadd.f32 %v1667, %v1733
        %v1739 = vadd.f32 %v1668, %v1733
        %v1740 = vadd.f32 %v1669, %v1733
        %v1741 = vadd.f32 %v1670, %v1733
        %v1742 = vadd.f32 %v1671, %v1733
        %v1743 = vadd.f32 %v1672, %v1733
        %v1744 = vadd.f32 %v1673, %v1733
        %v1745 = vadd.f32 %v1674, %v1733
        %v1746 = vadd.f32 %v1675, %v1733
        %v1747 = vadd.f32 %v1676, %v1733
        %v1748 = vadd.f32 %v1677, %v1733
        %v1749 = vadd.f32 %v1678, %v1733
        %v1750 = vadd.f32 %v1679, %v1733
        %v1751 = vadd.f32 %v1680, %v1733
        %v1752 = vadd.f32 %v1681, %v1733
        %v1753 = vadd.f32 %v1682, %v1733
        %v1754 = vadd.f32 %v1683, %v1733
        %v1755 = vadd.f32 %v1684, %v1733
        %v1756 = vadd.f32 %v1685, %v1733
        %v1757 = vadd.f32 %v1686, %v1733
        %v1758 = vadd.f32 %v1687, %v1733
        %v1759 = vadd.f32 %v1688, %v1733
        %v1760 = vadd.f32 %v1689, %v1733
        %v1761 = vadd.f32 %v1690, %v1733
        %v1762 = vadd.f32 %v1691, %v1733
        %v1763 = vadd.f32 %v1692, %v1733
        %v1764 = vadd.f32 %v1693, %v1733
        %v1765 = vadd.f32 %v1694, %v1733
        %v1766 = vadd.f32 %v1695, %v1733
        %v1767 = vadd.f32 %v1696, %v1733
        %v1768 = vadd.f32 %v1697, %v1733
        %v1769 = vadd.f32 %v1698, %v1733
        %v1770 = vadd.f32 %v1699, %v1733
        %v1771 = vadd.f32 %v1700, %v1733
        %v1772 = vadd.f32 %v1701, %v1733
        %v1773 = vadd.f32 %v1702, %v1733
        %v1774 = vadd.f32 %v1703, %v1733
        %v1775 = vadd.f32 %v1704, %v1733
        %v1776 = vadd.f32 %v1705, %v1733
        %v1777 = vadd.f32 %v1706, %v1733
        %v1778 = vadd.f32 %v1707, %v1733
        %v1779 = vadd.f32 %v1708, %v1733
        %v1780 = vadd.f32 %v1709, %v1733
        %v1781 = vadd.f32 %v1710, %v1733
        %v1782 = vadd.f32 %v1711, %v1733
        %v1783 = vadd.f32 %v1712, %v1733
        %v1784 = vadd.f32 %v1713, %v1733
        %v1785 = vadd.f32 %v1714, %v1733
        %v1786 = vadd.f32 %v1715, %v1733
        %v1787 = vadd.f32 %v1716, %v1733
        %v1788 = vadd.f32 %v1717, %v1733
        %v1789 = vadd.f32 %v1718, %v1733
        %v1790 = vadd.f32 %v1719, %v1733
        %v1791 = vadd.f32 %v1720, %v1733
        %v1792 = vadd.f32 %v1721, %v1733
        %v1793 = vadd.f32 %v1722, %v1733
        %v1794 = vadd.f32 %v1723, %v1733
        %v1795 = vadd.f32 %v1724, %v1733
        %v1796 = vadd.f32 %v1725, %v1733
        %v1797 = vadd.f32 %v1726, %v1733
        %v1798 = vadd.f32 %v1727, %v1733
        %v1799 = vmax.f32 %v1735, 0.0
        %v1800 = vmax.f32 %v1736, 0.0
        %v1801 = vmax.f32 %v1737, 0.0
        %v1802 = vmax.f32 %v1738, 0.0
        %v1803 = vmax.f32 %v1739, 0.0
        %v1804 = vmax.f32 %v1740, 0.0
        %v1805 = vmax.f32 %v1741, 0.0
        %v1806 = vmax.f32 %v1742, 0.0
        %v1807 = vmax.f32 %v1743, 0.0
        %v1808 = vmax.f32 %v1744, 0.0
        %v1809 = vmax.f32 %v1745, 0.0
        %v1810 = vmax.f32 %v1746, 0.0
        %v1811 = vmax.f32 %v1747, 0.0
        %v1812 = vmax.f32 %v1748, 0.0
        %v1813 = vmax.f32 %v1749, 0.0
        %v1814 = vmax.f32 %v1750, 0.0
        %v1815 = vmax.f32 %v1751, 0.0
        %v1816 = vmax.f32 %v1752, 0.0
        %v1817 = vmax.f32 %v1753, 0.0
        %v1818 = vmax.f32 %v1754, 0.0
        %v1819 = vmax.f32 %v1755, 0.0
        %v1820 = vmax.f32 %v1756, 0.0
        %v1821 = vmax.f32 %v1757, 0.0
        %v1822 = vmax.f32 %v1758, 0.0
        %v1823 = vmax.f32 %v1759, 0.0
        %v1824 = vmax.f32 %v1760, 0.0
        %v1825 = vmax.f32 %v1761, 0.0
        %v1826 = vmax.f32 %v1762, 0.0
        %v1827 = vmax.f32 %v1763, 0.0
        %v1828 = vmax.f32 %v1764, 0.0
        %v1829 = vmax.f32 %v1765, 0.0
        %v1830 = vmax.f32 %v1766, 0.0
        %v1831 = vmax.f32 %v1767, 0.0
        %v1832 = vmax.f32 %v1768, 0.0
        %v1833 = vmax.f32 %v1769, 0.0
        %v1834 = vmax.f32 %v1770, 0.0
        %v1835 = vmax.f32 %v1771, 0.0
        %v1836 = vmax.f32 %v1772, 0.0
        %v1837 = vmax.f32 %v1773, 0.0
        %v1838 = vmax.f32 %v1774, 0.0
        %v1839 = vmax.f32 %v1775, 0.0
        %v1840 = vmax.f32 %v1776, 0.0
        %v1841 = vmax.f32 %v1777, 0.0
        %v1842 = vmax.f32 %v1778, 0.0
        %v1843 = vmax.f32 %v1779, 0.0
        %v1844 = vmax.f32 %v1780, 0.0
        %v1845 = vmax.f32 %v1781, 0.0
        %v1846 = vmax.f32 %v1782, 0.0
        %v1847 = vmax.f32 %v1783, 0.0
        %v1848 = vmax.f32 %v1784, 0.0
        %v1849 = vmax.f32 %v1785, 0.0
        %v1850 = vmax.f32 %v1786, 0.0
        %v1851 = vmax.f32 %v1787, 0.0
        %v1852 = vmax.f32 %v1788, 0.0
        %v1853 = vmax.f32 %v1789, 0.0
        %v1854 = vmax.f32 %v1790, 0.0
        %v1855 = vmax.f32 %v1791, 0.0
        %v1856 = vmax.f32 %v1792, 0.0
        %v1857 = vmax.f32 %v1793, 0.0
        %v1858 = vmax.f32 %v1794, 0.0
        %v1859 = vmax.f32 %v1795, 0.0
        %v1860 = vmax.f32 %v1796, 0.0
        %v1861 = vmax.f32 %v1797, 0.0
        %v1862 = vmax.f32 %v1798, 0.0
        %v1863 = vld [vmem:[%s4] sm:$0xff]
        %v1864 = vld [vmem:[%s4 + $0x8] sm:$0xff]
        %v1865 = vld [vmem:[%s4 + $0x10] sm:$0xff]
        %v1866 = vld [vmem:[%s4 + $0x18] sm:$0xff]
        %v1867 = vld [vmem:[%s5] sm:$0x1]
        %v1869 = vlaneseq
        %v1870 = vshrl.u32 %v1869, 7
        %v1871 = vsub.s32 0, %v1870
        %v1872 = vrot.slane %v1867, %v1871
        %vm1874 = vcmask 261120
        %v1876 = vsel %vm1874, %v1799, 0
        %v1879 = vsel %vm1874, %v1800, 0
        %v1882 = vsel %vm1874, %v1801, 0
        %v1885 = vsel %vm1874, %v1802, 0
        %v1888 = vsel %vm1874, %v1803, 0
        %v1891 = vsel %vm1874, %v1804, 0
        %v1894 = vsel %vm1874, %v1805, 0
        %v1897 = vsel %vm1874, %v1806, 0
        %v1900 = vsel %vm1874, %v1807, 0
        %v1903 = vsel %vm1874, %v1808, 0
        %v1906 = vsel %vm1874, %v1809, 0
        %v1909 = vsel %vm1874, %v1810, 0
        %v1912 = vsel %vm1874, %v1811, 0
        %v1915 = vsel %vm1874, %v1812, 0
        %v1918 = vsel %vm1874, %v1813, 0
        %v1921 = vsel %vm1874, %v1814, 0
        %v1924 = vsel %vm1874, %v1815, 0
        %v1927 = vsel %vm1874, %v1816, 0
        %v1930 = vsel %vm1874, %v1817, 0
        %v1933 = vsel %vm1874, %v1818, 0
        %v1936 = vsel %vm1874, %v1819, 0
        %v1939 = vsel %vm1874, %v1820, 0
        %v1942 = vsel %vm1874, %v1821, 0
        %v1945 = vsel %vm1874, %v1822, 0
        %v1948 = vsel %vm1874, %v1823, 0
        %v1951 = vsel %vm1874, %v1824, 0
        %v1954 = vsel %vm1874, %v1825, 0
        %v1957 = vsel %vm1874, %v1826, 0
        %v1960 = vsel %vm1874, %v1827, 0
        %v1963 = vsel %vm1874, %v1828, 0
        %v1966 = vsel %vm1874, %v1829, 0
        %v1969 = vsel %vm1874, %v1830, 0
        %v1972 = vsel %vm1874, %v1831, 0
        %v1975 = vsel %vm1874, %v1832, 0
        %v1978 = vsel %vm1874, %v1833, 0
        %v1981 = vsel %vm1874, %v1834, 0
        %v1984 = vsel %vm1874, %v1835, 0
        %v1987 = vsel %vm1874, %v1836, 0
        %v1990 = vsel %vm1874, %v1837, 0
        %v1993 = vsel %vm1874, %v1838, 0
        %v1996 = vsel %vm1874, %v1839, 0
        %v1999 = vsel %vm1874, %v1840, 0
        %v2002 = vsel %vm1874, %v1841, 0
        %v2005 = vsel %vm1874, %v1842, 0
        %v2008 = vsel %vm1874, %v1843, 0
        %v2011 = vsel %vm1874, %v1844, 0
        %v2014 = vsel %vm1874, %v1845, 0
        %v2017 = vsel %vm1874, %v1846, 0
        %v2020 = vsel %vm1874, %v1847, 0
        %v2023 = vsel %vm1874, %v1848, 0
        %v2026 = vsel %vm1874, %v1849, 0
        %v2029 = vsel %vm1874, %v1850, 0
        %v2032 = vsel %vm1874, %v1851, 0
        %v2035 = vsel %vm1874, %v1852, 0
        %v2038 = vsel %vm1874, %v1853, 0
        %v2041 = vsel %vm1874, %v1854, 0
        %v2044 = vsel %vm1874, %v1855, 0
        %v2047 = vsel %vm1874, %v1856, 0
        %v2050 = vsel %vm1874, %v1857, 0
        %v2053 = vsel %vm1874, %v1858, 0
        %v2056 = vsel %vm1874, %v1859, 0
        %v2059 = vsel %vm1874, %v1860, 0
        %v2062 = vsel %vm1874, %v1861, 0
        %v2065 = vsel %vm1874, %v1862, 0
        %2067 = vmatprep.subr.mxu0 0.0
        %2068 = vmatpush1.msra.mxu0 0.0
        %2069 = vmatprep.subr.mxu0 0.0
        %2070 = vmatpush1.msra.mxu0 0.0
        %2071 = vmatprep.subr.mxu0 0.0
        %2072 = vmatpush1.msra.mxu0 0.0
        %2073 = vmatprep.subr.mxu0 0.0
        %2074 = vmatpush1.msra.mxu0 0.0
        %2075 = vmatprep.subr.mxu0 0.0
        %2076 = vmatpush1.msra.mxu0 0.0
        %2077 = vmatprep.subr.mxu0 0.0
        %2078 = vmatpush1.msra.mxu0 0.0
        %2079 = vmatprep.subr.mxu0 0.0
        %2080 = vmatpush1.msra.mxu0 0.0
        %2081 = vmatprep.subr.mxu0 0.0
        %2082 = vmatpush1.msra.mxu0 0.0
        %2083 = vmatprep.subr.mxu0 0.0
        %2084 = vmatpush1.msra.mxu0 0.0
        %2085 = vmatprep.subr.mxu0 0.0
        %2086 = vmatpush1.msra.mxu0 0.0
        %2087 = vmatprep.subr.mxu0 0.0
        %2088 = vmatpush1.msra.mxu0 0.0
        %2089 = vmatprep.subr.mxu0 0.0
        %2090 = vmatpush1.msra.mxu0 0.0
        %2091 = vmatprep.subr.mxu0 0.0
        %2092 = vmatpush1.msra.mxu0 %v1866
        %2093 = vmatprep.subr.mxu0 0.0
        %2094 = vmatpush1.msra.mxu0 %v1865
        %2095 = vmatprep.subr.mxu0 0.0
        %2096 = vmatpush1.msra.mxu0 %v1864
        %2097 = vmatprep.subr.mxu0 0.0
        %2098 = vmatpush1.msra.mxu0 %v1863
        %2099 = vmatprep.subr.mxu0 0.0
        %2100 = vmatpush2.msra.mxu0 0.0
        %2101 = vmatprep.subr.mxu0 0.0
        %2102 = vmatpush2.msra.mxu0 0.0
        %2103 = vmatprep.subr.mxu0 0.0
        %2104 = vmatpush2.msra.mxu0 0.0
        %2105 = vmatprep.subr.mxu0 0.0
        %2106 = vmatpush2.msra.mxu0 0.0
        %2107 = vmatprep.subr.mxu0 0.0
        %2108 = vmatpush2.msra.mxu0 0.0
        %2109 = vmatprep.subr.mxu0 0.0
        %2110 = vmatpush2.msra.mxu0 0.0
        %2111 = vmatprep.subr.mxu0 0.0
        %2112 = vmatpush2.msra.mxu0 0.0
        %2113 = vmatprep.subr.mxu0 0.0
        %2114 = vmatpush2.msra.mxu0 0.0
        %2115 = vmatprep.subr.mxu0 0.0
        %2116 = vmatpush2.msra.mxu0 0.0
        %2117 = vmatprep.subr.mxu0 0.0
        %2118 = vmatpush2.msra.mxu0 0.0
        %2119 = vmatprep.subr.mxu0 0.0
        %2120 = vmatpush2.msra.mxu0 0.0
        %2121 = vmatprep.subr.mxu0 0.0
        %2122 = vmatpush2.msra.mxu0 0.0
        %2123 = vmatprep.subr.mxu0 0.0
        %2124 = vmatpush2.msra.mxu0 0.0
        %2125 = vmatprep.subr.mxu0 0.0
        %2126 = vmatpush2.msra.mxu0 0.0
        %2127 = vmatprep.subr.mxu0 0.0
        %2128 = vmatpush2.msra.mxu0 0.0
        %2129 = vmatprep.subr.mxu0 0.0
        %2130 = vmatpush2.msra.mxu0 0.0
        %2131 = vmatprep.mubr.f32.mxu0 0.0
        %2132 = vmatmul.mubr.f32.gmra.mxu0 %v1876
        %v2133 = vpop.f32.mrf.mxu0
        %v2134 = vadd.f32 %v1872, %v2133
        %v2135 = vpop.f32.mrf.mxu0
        %2136 = vmatprep.mubr.f32.mxu0 0.0
        %2137 = vmatmul.mubr.f32.gmra.mxu0 %v1879
        %v2138 = vpop.f32.mrf.mxu0
        %v2139 = vadd.f32 %v1872, %v2138
        %v2140 = vpop.f32.mrf.mxu0
        %2141 = vmatprep.mubr.f32.mxu0 0.0
        %2142 = vmatmul.mubr.f32.gmra.mxu0 %v1882
        %v2143 = vpop.f32.mrf.mxu0
        %v2144 = vadd.f32 %v1872, %v2143
        %v2145 = vpop.f32.mrf.mxu0
        %2146 = vmatprep.mubr.f32.mxu0 0.0
        %2147 = vmatmul.mubr.f32.gmra.mxu0 %v1885
        %v2148 = vpop.f32.mrf.mxu0
        %v2149 = vadd.f32 %v1872, %v2148
        %v2150 = vpop.f32.mrf.mxu0
        %2151 = vmatprep.mubr.f32.mxu0 0.0
        %2152 = vmatmul.mubr.f32.gmra.mxu0 %v1888
        %v2153 = vpop.f32.mrf.mxu0
        %v2154 = vadd.f32 %v1872, %v2153
        %v2155 = vpop.f32.mrf.mxu0
        %2156 = vmatprep.mubr.f32.mxu0 0.0
        %2157 = vmatmul.mubr.f32.gmra.mxu0 %v1891
        %v2158 = vpop.f32.mrf.mxu0
        %v2159 = vadd.f32 %v1872, %v2158
        %v2160 = vpop.f32.mrf.mxu0
        %2161 = vmatprep.mubr.f32.mxu0 0.0
        %2162 = vmatmul.mubr.f32.gmra.mxu0 %v1894
        %v2163 = vpop.f32.mrf.mxu0
        %v2164 = vadd.f32 %v1872, %v2163
        %v2165 = vpop.f32.mrf.mxu0
        %2166 = vmatprep.mubr.f32.mxu0 0.0
        %2167 = vmatmul.mubr.f32.gmra.mxu0 %v1897
        %v2168 = vpop.f32.mrf.mxu0
        %v2169 = vadd.f32 %v1872, %v2168
        %v2170 = vpop.f32.mrf.mxu0
        %2171 = vmatprep.mubr.f32.mxu0 0.0
        %2172 = vmatmul.mubr.f32.gmra.mxu0 %v1900
        %v2173 = vpop.f32.mrf.mxu0
        %v2174 = vadd.f32 %v1872, %v2173
        %v2175 = vpop.f32.mrf.mxu0
        %2176 = vmatprep.mubr.f32.mxu0 0.0
        %2177 = vmatmul.mubr.f32.gmra.mxu0 %v1903
        %v2178 = vpop.f32.mrf.mxu0
        %v2179 = vadd.f32 %v1872, %v2178
        %v2180 = vpop.f32.mrf.mxu0
        %2181 = vmatprep.mubr.f32.mxu0 0.0
        %2182 = vmatmul.mubr.f32.gmra.mxu0 %v1906
        %v2183 = vpop.f32.mrf.mxu0
        %v2184 = vadd.f32 %v1872, %v2183
        %v2185 = vpop.f32.mrf.mxu0
        %2186 = vmatprep.mubr.f32.mxu0 0.0
        %2187 = vmatmul.mubr.f32.gmra.mxu0 %v1909
        %v2188 = vpop.f32.mrf.mxu0
        %v2189 = vadd.f32 %v1872, %v2188
        %v2190 = vpop.f32.mrf.mxu0
        %2191 = vmatprep.mubr.f32.mxu0 0.0
        %2192 = vmatmul.mubr.f32.gmra.mxu0 %v1912
        %v2193 = vpop.f32.mrf.mxu0
        %v2194 = vadd.f32 %v1872, %v2193
        %v2195 = vpop.f32.mrf.mxu0
        %2196 = vmatprep.mubr.f32.mxu0 0.0
        %2197 = vmatmul.mubr.f32.gmra.mxu0 %v1915
        %v2198 = vpop.f32.mrf.mxu0
        %v2199 = vadd.f32 %v1872, %v2198
        %v2200 = vpop.f32.mrf.mxu0
        %2201 = vmatprep.mubr.f32.mxu0 0.0
        %2202 = vmatmul.mubr.f32.gmra.mxu0 %v1918
        %v2203 = vpop.f32.mrf.mxu0
        %v2204 = vadd.f32 %v1872, %v2203
        %v2205 = vpop.f32.mrf.mxu0
        %2206 = vmatprep.mubr.f32.mxu0 0.0
        %2207 = vmatmul.mubr.f32.gmra.mxu0 %v1921
        %v2208 = vpop.f32.mrf.mxu0
        %v2209 = vadd.f32 %v1872, %v2208
        %v2210 = vpop.f32.mrf.mxu0
        %2211 = vmatprep.mubr.f32.mxu0 0.0
        %2212 = vmatmul.mubr.f32.gmra.mxu0 %v1924
        %v2213 = vpop.f32.mrf.mxu0
        %v2214 = vadd.f32 %v1872, %v2213
        %v2215 = vpop.f32.mrf.mxu0
        %2216 = vmatprep.mubr.f32.mxu0 0.0
        %2217 = vmatmul.mubr.f32.gmra.mxu0 %v1927
        %v2218 = vpop.f32.mrf.mxu0
        %v2219 = vadd.f32 %v1872, %v2218
        %v2220 = vpop.f32.mrf.mxu0
        %2221 = vmatprep.mubr.f32.mxu0 0.0
        %2222 = vmatmul.mubr.f32.gmra.mxu0 %v1930
        %v2223 = vpop.f32.mrf.mxu0
        %v2224 = vadd.f32 %v1872, %v2223
        %v2225 = vpop.f32.mrf.mxu0
        %2226 = vmatprep.mubr.f32.mxu0 0.0
        %2227 = vmatmul.mubr.f32.gmra.mxu0 %v1933
        %v2228 = vpop.f32.mrf.mxu0
        %v2229 = vadd.f32 %v1872, %v2228
        %v2230 = vpop.f32.mrf.mxu0
        %2231 = vmatprep.mubr.f32.mxu0 0.0
        %2232 = vmatmul.mubr.f32.gmra.mxu0 %v1936
        %v2233 = vpop.f32.mrf.mxu0
        %v2234 = vadd.f32 %v1872, %v2233
        %v2235 = vpop.f32.mrf.mxu0
        %2236 = vmatprep.mubr.f32.mxu0 0.0
        %2237 = vmatmul.mubr.f32.gmra.mxu0 %v1939
        %v2238 = vpop.f32.mrf.mxu0
        %v2239 = vadd.f32 %v1872, %v2238
        %v2240 = vpop.f32.mrf.mxu0
        %2241 = vmatprep.mubr.f32.mxu0 0.0
        %2242 = vmatmul.mubr.f32.gmra.mxu0 %v1942
        %v2243 = vpop.f32.mrf.mxu0
        %v2244 = vadd.f32 %v1872, %v2243
        %v2245 = vpop.f32.mrf.mxu0
        %2246 = vmatprep.mubr.f32.mxu0 0.0
        %2247 = vmatmul.mubr.f32.gmra.mxu0 %v1945
        %v2248 = vpop.f32.mrf.mxu0
        %v2249 = vadd.f32 %v1872, %v2248
        %v2250 = vpop.f32.mrf.mxu0
        %2251 = vmatprep.mubr.f32.mxu0 0.0
        %2252 = vmatmul.mubr.f32.gmra.mxu0 %v1948
        %v2253 = vpop.f32.mrf.mxu0
        %v2254 = vadd.f32 %v1872, %v2253
        %v2255 = vpop.f32.mrf.mxu0
        %2256 = vmatprep.mubr.f32.mxu0 0.0
        %2257 = vmatmul.mubr.f32.gmra.mxu0 %v1951
        %v2258 = vpop.f32.mrf.mxu0
        %v2259 = vadd.f32 %v1872, %v2258
        %v2260 = vpop.f32.mrf.mxu0
        %2261 = vmatprep.mubr.f32.mxu0 0.0
        %2262 = vmatmul.mubr.f32.gmra.mxu0 %v1954
        %v2263 = vpop.f32.mrf.mxu0
        %v2264 = vadd.f32 %v1872, %v2263
        %v2265 = vpop.f32.mrf.mxu0
        %2266 = vmatprep.mubr.f32.mxu0 0.0
        %2267 = vmatmul.mubr.f32.gmra.mxu0 %v1957
        %v2268 = vpop.f32.mrf.mxu0
        %v2269 = vadd.f32 %v1872, %v2268
        %v2270 = vpop.f32.mrf.mxu0
        %2271 = vmatprep.mubr.f32.mxu0 0.0
        %2272 = vmatmul.mubr.f32.gmra.mxu0 %v1960
        %v2273 = vpop.f32.mrf.mxu0
        %v2274 = vadd.f32 %v1872, %v2273
        %v2275 = vpop.f32.mrf.mxu0
        %2276 = vmatprep.mubr.f32.mxu0 0.0
        %2277 = vmatmul.mubr.f32.gmra.mxu0 %v1963
        %v2278 = vpop.f32.mrf.mxu0
        %v2279 = vadd.f32 %v1872, %v2278
        %v2280 = vpop.f32.mrf.mxu0
        %2281 = vmatprep.mubr.f32.mxu0 0.0
        %2282 = vmatmul.mubr.f32.gmra.mxu0 %v1966
        %v2283 = vpop.f32.mrf.mxu0
        %v2284 = vadd.f32 %v1872, %v2283
        %v2285 = vpop.f32.mrf.mxu0
        %2286 = vmatprep.mubr.f32.mxu0 0.0
        %2287 = vmatmul.mubr.f32.gmra.mxu0 %v1969
        %v2288 = vpop.f32.mrf.mxu0
        %v2289 = vadd.f32 %v1872, %v2288
        %v2290 = vpop.f32.mrf.mxu0
        %2291 = vmatprep.mubr.f32.mxu0 0.0
        %2292 = vmatmul.mubr.f32.gmra.mxu0 %v1972
        %v2293 = vpop.f32.mrf.mxu0
        %v2294 = vadd.f32 %v1872, %v2293
        %v2295 = vpop.f32.mrf.mxu0
        %2296 = vmatprep.mubr.f32.mxu0 0.0
        %2297 = vmatmul.mubr.f32.gmra.mxu0 %v1975
        %v2298 = vpop.f32.mrf.mxu0
        %v2299 = vadd.f32 %v1872, %v2298
        %v2300 = vpop.f32.mrf.mxu0
        %2301 = vmatprep.mubr.f32.mxu0 0.0
        %2302 = vmatmul.mubr.f32.gmra.mxu0 %v1978
        %v2303 = vpop.f32.mrf.mxu0
        %v2304 = vadd.f32 %v1872, %v2303
        %v2305 = vpop.f32.mrf.mxu0
        %2306 = vmatprep.mubr.f32.mxu0 0.0
        %2307 = vmatmul.mubr.f32.gmra.mxu0 %v1981
        %v2308 = vpop.f32.mrf.mxu0
        %v2309 = vadd.f32 %v1872, %v2308
        %v2310 = vpop.f32.mrf.mxu0
        %2311 = vmatprep.mubr.f32.mxu0 0.0
        %2312 = vmatmul.mubr.f32.gmra.mxu0 %v1984
        %v2313 = vpop.f32.mrf.mxu0
        %v2314 = vadd.f32 %v1872, %v2313
        %v2315 = vpop.f32.mrf.mxu0
        %2316 = vmatprep.mubr.f32.mxu0 0.0
        %2317 = vmatmul.mubr.f32.gmra.mxu0 %v1987
        %v2318 = vpop.f32.mrf.mxu0
        %v2319 = vadd.f32 %v1872, %v2318
        %v2320 = vpop.f32.mrf.mxu0
        %2321 = vmatprep.mubr.f32.mxu0 0.0
        %2322 = vmatmul.mubr.f32.gmra.mxu0 %v1990
        %v2323 = vpop.f32.mrf.mxu0
        %v2324 = vadd.f32 %v1872, %v2323
        %v2325 = vpop.f32.mrf.mxu0
        %2326 = vmatprep.mubr.f32.mxu0 0.0
        %2327 = vmatmul.mubr.f32.gmra.mxu0 %v1993
        %v2328 = vpop.f32.mrf.mxu0
        %v2329 = vadd.f32 %v1872, %v2328
        %v2330 = vpop.f32.mrf.mxu0
        %2331 = vmatprep.mubr.f32.mxu0 0.0
        %2332 = vmatmul.mubr.f32.gmra.mxu0 %v1996
        %v2333 = vpop.f32.mrf.mxu0
        %v2334 = vadd.f32 %v1872, %v2333
        %v2335 = vpop.f32.mrf.mxu0
        %2336 = vmatprep.mubr.f32.mxu0 0.0
        %2337 = vmatmul.mubr.f32.gmra.mxu0 %v1999
        %v2338 = vpop.f32.mrf.mxu0
        %v2339 = vadd.f32 %v1872, %v2338
        %v2340 = vpop.f32.mrf.mxu0
        %2341 = vmatprep.mubr.f32.mxu0 0.0
        %2342 = vmatmul.mubr.f32.gmra.mxu0 %v2002
        %v2343 = vpop.f32.mrf.mxu0
        %v2344 = vadd.f32 %v1872, %v2343
        %v2345 = vpop.f32.mrf.mxu0
        %2346 = vmatprep.mubr.f32.mxu0 0.0
        %2347 = vmatmul.mubr.f32.gmra.mxu0 %v2005
        %v2348 = vpop.f32.mrf.mxu0
        %v2349 = vadd.f32 %v1872, %v2348
        %v2350 = vpop.f32.mrf.mxu0
        %2351 = vmatprep.mubr.f32.mxu0 0.0
        %2352 = vmatmul.mubr.f32.gmra.mxu0 %v2008
        %v2353 = vpop.f32.mrf.mxu0
        %v2354 = vadd.f32 %v1872, %v2353
        %v2355 = vpop.f32.mrf.mxu0
        %2356 = vmatprep.mubr.f32.mxu0 0.0
        %2357 = vmatmul.mubr.f32.gmra.mxu0 %v2011
        %v2358 = vpop.f32.mrf.mxu0
        %v2359 = vadd.f32 %v1872, %v2358
        %v2360 = vpop.f32.mrf.mxu0
        %2361 = vmatprep.mubr.f32.mxu0 0.0
        %2362 = vmatmul.mubr.f32.gmra.mxu0 %v2014
        %v2363 = vpop.f32.mrf.mxu0
        %v2364 = vadd.f32 %v1872, %v2363
        %v2365 = vpop.f32.mrf.mxu0
        %2366 = vmatprep.mubr.f32.mxu0 0.0
        %2367 = vmatmul.mubr.f32.gmra.mxu0 %v2017
        %v2368 = vpop.f32.mrf.mxu0
        %v2369 = vadd.f32 %v1872, %v2368
        %v2370 = vpop.f32.mrf.mxu0
        %2371 = vmatprep.mubr.f32.mxu0 0.0
        %2372 = vmatmul.mubr.f32.gmra.mxu0 %v2020
        %v2373 = vpop.f32.mrf.mxu0
        %v2374 = vadd.f32 %v1872, %v2373
        %v2375 = vpop.f32.mrf.mxu0
        %2376 = vmatprep.mubr.f32.mxu0 0.0
        %2377 = vmatmul.mubr.f32.gmra.mxu0 %v2023
        %v2378 = vpop.f32.mrf.mxu0
        %v2379 = vadd.f32 %v1872, %v2378
        %v2380 = vpop.f32.mrf.mxu0
        %2381 = vmatprep.mubr.f32.mxu0 0.0
        %2382 = vmatmul.mubr.f32.gmra.mxu0 %v2026
        %v2383 = vpop.f32.mrf.mxu0
        %v2384 = vadd.f32 %v1872, %v2383
        %v2385 = vpop.f32.mrf.mxu0
        %2386 = vmatprep.mubr.f32.mxu0 0.0
        %2387 = vmatmul.mubr.f32.gmra.mxu0 %v2029
        %v2388 = vpop.f32.mrf.mxu0
        %v2389 = vadd.f32 %v1872, %v2388
        %v2390 = vpop.f32.mrf.mxu0
        %2391 = vmatprep.mubr.f32.mxu0 0.0
        %2392 = vmatmul.mubr.f32.gmra.mxu0 %v2032
        %v2393 = vpop.f32.mrf.mxu0
        %v2394 = vadd.f32 %v1872, %v2393
        %v2395 = vpop.f32.mrf.mxu0
        %2396 = vmatprep.mubr.f32.mxu0 0.0
        %2397 = vmatmul.mubr.f32.gmra.mxu0 %v2035
        %v2398 = vpop.f32.mrf.mxu0
        %v2399 = vadd.f32 %v1872, %v2398
        %v2400 = vpop.f32.mrf.mxu0
        %2401 = vmatprep.mubr.f32.mxu0 0.0
        %2402 = vmatmul.mubr.f32.gmra.mxu0 %v2038
        %v2403 = vpop.f32.mrf.mxu0
        %v2404 = vadd.f32 %v1872, %v2403
        %v2405 = vpop.f32.mrf.mxu0
        %2406 = vmatprep.mubr.f32.mxu0 0.0
        %2407 = vmatmul.mubr.f32.gmra.mxu0 %v2041
        %v2408 = vpop.f32.mrf.mxu0
        %v2409 = vadd.f32 %v1872, %v2408
        %v2410 = vpop.f32.mrf.mxu0
        %2411 = vmatprep.mubr.f32.mxu0 0.0
        %2412 = vmatmul.mubr.f32.gmra.mxu0 %v2044
        %v2413 = vpop.f32.mrf.mxu0
        %v2414 = vadd.f32 %v1872, %v2413
        %v2415 = vpop.f32.mrf.mxu0
        %2416 = vmatprep.mubr.f32.mxu0 0.0
        %2417 = vmatmul.mubr.f32.gmra.mxu0 %v2047
        %v2418 = vpop.f32.mrf.mxu0
        %v2419 = vadd.f32 %v1872, %v2418
        %v2420 = vpop.f32.mrf.mxu0
        %2421 = vmatprep.mubr.f32.mxu0 0.0
        %2422 = vmatmul.mubr.f32.gmra.mxu0 %v2050
        %v2423 = vpop.f32.mrf.mxu0
        %v2424 = vadd.f32 %v1872, %v2423
        %v2425 = vpop.f32.mrf.mxu0
        %2426 = vmatprep.mubr.f32.mxu0 0.0
        %2427 = vmatmul.mubr.f32.gmra.mxu0 %v2053
        %v2428 = vpop.f32.mrf.mxu0
        %v2429 = vadd.f32 %v1872, %v2428
        %v2430 = vpop.f32.mrf.mxu0
        %2431 = vmatprep.mubr.f32.mxu0 0.0
        %2432 = vmatmul.mubr.f32.gmra.mxu0 %v2056
        %v2433 = vpop.f32.mrf.mxu0
        %v2434 = vadd.f32 %v1872, %v2433
        %v2435 = vpop.f32.mrf.mxu0
        %2436 = vmatprep.mubr.f32.mxu0 0.0
        %2437 = vmatmul.mubr.f32.gmra.mxu0 %v2059
        %v2438 = vpop.f32.mrf.mxu0
        %v2439 = vadd.f32 %v1872, %v2438
        %v2440 = vpop.f32.mrf.mxu0
        %2441 = vmatprep.mubr.f32.mxu0 0.0
        %2442 = vmatmul.mubr.f32.gmra.mxu0 %v2062
        %v2443 = vpop.f32.mrf.mxu0
        %v2444 = vadd.f32 %v1872, %v2443
        %v2445 = vpop.f32.mrf.mxu0
        %2446 = vmatprep.mubr.f32.mxu0 0.0
        %2447 = vmatmul.mubr.f32.gmra.mxu0 %v2065
        %v2448 = vpop.f32.mrf.mxu0
        %v2449 = vadd.f32 %v1872, %v2448
        %v2450 = vpop.f32.mrf.mxu0
        %2451 = vdwg.mxu0
        %v2452 = vmax.f32 %v2134, 0.0
        %v2453 = vmax.f32 %v2139, 0.0
        %v2454 = vmax.f32 %v2144, 0.0
        %v2455 = vmax.f32 %v2149, 0.0
        %v2456 = vmax.f32 %v2154, 0.0
        %v2457 = vmax.f32 %v2159, 0.0
        %v2458 = vmax.f32 %v2164, 0.0
        %v2459 = vmax.f32 %v2169, 0.0
        %v2460 = vmax.f32 %v2174, 0.0
        %v2461 = vmax.f32 %v2179, 0.0
        %v2462 = vmax.f32 %v2184, 0.0
        %v2463 = vmax.f32 %v2189, 0.0
        %v2464 = vmax.f32 %v2194, 0.0
        %v2465 = vmax.f32 %v2199, 0.0
        %v2466 = vmax.f32 %v2204, 0.0
        %v2467 = vmax.f32 %v2209, 0.0
        %v2468 = vmax.f32 %v2214, 0.0
        %v2469 = vmax.f32 %v2219, 0.0
        %v2470 = vmax.f32 %v2224, 0.0
        %v2471 = vmax.f32 %v2229, 0.0
        %v2472 = vmax.f32 %v2234, 0.0
        %v2473 = vmax.f32 %v2239, 0.0
        %v2474 = vmax.f32 %v2244, 0.0
        %v2475 = vmax.f32 %v2249, 0.0
        %v2476 = vmax.f32 %v2254, 0.0
        %v2477 = vmax.f32 %v2259, 0.0
        %v2478 = vmax.f32 %v2264, 0.0
        %v2479 = vmax.f32 %v2269, 0.0
        %v2480 = vmax.f32 %v2274, 0.0
        %v2481 = vmax.f32 %v2279, 0.0
        %v2482 = vmax.f32 %v2284, 0.0
        %v2483 = vmax.f32 %v2289, 0.0
        %v2484 = vmax.f32 %v2294, 0.0
        %v2485 = vmax.f32 %v2299, 0.0
        %v2486 = vmax.f32 %v2304, 0.0
        %v2487 = vmax.f32 %v2309, 0.0
        %v2488 = vmax.f32 %v2314, 0.0
        %v2489 = vmax.f32 %v2319, 0.0
        %v2490 = vmax.f32 %v2324, 0.0
        %v2491 = vmax.f32 %v2329, 0.0
        %v2492 = vmax.f32 %v2334, 0.0
        %v2493 = vmax.f32 %v2339, 0.0
        %v2494 = vmax.f32 %v2344, 0.0
        %v2495 = vmax.f32 %v2349, 0.0
        %v2496 = vmax.f32 %v2354, 0.0
        %v2497 = vmax.f32 %v2359, 0.0
        %v2498 = vmax.f32 %v2364, 0.0
        %v2499 = vmax.f32 %v2369, 0.0
        %v2500 = vmax.f32 %v2374, 0.0
        %v2501 = vmax.f32 %v2379, 0.0
        %v2502 = vmax.f32 %v2384, 0.0
        %v2503 = vmax.f32 %v2389, 0.0
        %v2504 = vmax.f32 %v2394, 0.0
        %v2505 = vmax.f32 %v2399, 0.0
        %v2506 = vmax.f32 %v2404, 0.0
        %v2507 = vmax.f32 %v2409, 0.0
        %v2508 = vmax.f32 %v2414, 0.0
        %v2509 = vmax.f32 %v2419, 0.0
        %v2510 = vmax.f32 %v2424, 0.0
        %v2511 = vmax.f32 %v2429, 0.0
        %v2512 = vmax.f32 %v2434, 0.0
        %v2513 = vmax.f32 %v2439, 0.0
        %v2514 = vmax.f32 %v2444, 0.0
        %v2515 = vmax.f32 %v2449, 0.0
        %v2516 = vld [vmem:[%s6] sm:$0xff]
        %v2517 = vld [vmem:[%s6 + $0x8] sm:$0xff]
        %v2518 = vld [vmem:[%s6 + $0x10] sm:$0xff]
        %v2519 = vld [vmem:[%s6 + $0x18] sm:$0xff]
        %v2520 = vld [vmem:[%s6 + $0x20] sm:$0xff]
        %v2521 = vld [vmem:[%s6 + $0x28] sm:$0xff]
        %v2522 = vld [vmem:[%s6 + $0x30] sm:$0xff]
        %v2523 = vld [vmem:[%s6 + $0x38] sm:$0xff]
        %v2524 = vld [vmem:[%s7] sm:$0x1]
        %v2526 = vlaneseq
        %v2527 = vshrl.u32 %v2526, 7
        %v2528 = vsub.s32 0, %v2527
        %v2529 = vrot.slane %v2524, %v2528
        %vm2531 = vcmask 523264
        %v2533 = vsel %vm2531, %v2452, 0
        %v2536 = vsel %vm2531, %v2453, 0
        %v2539 = vsel %vm2531, %v2454, 0
        %v2542 = vsel %vm2531, %v2455, 0
        %v2545 = vsel %vm2531, %v2456, 0
        %v2548 = vsel %vm2531, %v2457, 0
        %v2551 = vsel %vm2531, %v2458, 0
        %v2554 = vsel %vm2531, %v2459, 0
        %v2557 = vsel %vm2531, %v2460, 0
        %v2560 = vsel %vm2531, %v2461, 0
        %v2563 = vsel %vm2531, %v2462, 0
        %v2566 = vsel %vm2531, %v2463, 0
        %v2569 = vsel %vm2531, %v2464, 0
        %v2572 = vsel %vm2531, %v2465, 0
        %v2575 = vsel %vm2531, %v2466, 0
        %v2578 = vsel %vm2531, %v2467, 0
        %v2581 = vsel %vm2531, %v2468, 0
        %v2584 = vsel %vm2531, %v2469, 0
        %v2587 = vsel %vm2531, %v2470, 0
        %v2590 = vsel %vm2531, %v2471, 0
        %v2593 = vsel %vm2531, %v2472, 0
        %v2596 = vsel %vm2531, %v2473, 0
        %v2599 = vsel %vm2531, %v2474, 0
        %v2602 = vsel %vm2531, %v2475, 0
        %v2605 = vsel %vm2531, %v2476, 0
        %v2608 = vsel %vm2531, %v2477, 0
        %v2611 = vsel %vm2531, %v2478, 0
        %v2614 = vsel %vm2531, %v2479, 0
        %v2617 = vsel %vm2531, %v2480, 0
        %v2620 = vsel %vm2531, %v2481, 0
        %v2623 = vsel %vm2531, %v2482, 0
        %v2626 = vsel %vm2531, %v2483, 0
        %v2629 = vsel %vm2531, %v2484, 0
        %v2632 = vsel %vm2531, %v2485, 0
        %v2635 = vsel %vm2531, %v2486, 0
        %v2638 = vsel %vm2531, %v2487, 0
        %v2641 = vsel %vm2531, %v2488, 0
        %v2644 = vsel %vm2531, %v2489, 0
        %v2647 = vsel %vm2531, %v2490, 0
        %v2650 = vsel %vm2531, %v2491, 0
        %v2653 = vsel %vm2531, %v2492, 0
        %v2656 = vsel %vm2531, %v2493, 0
        %v2659 = vsel %vm2531, %v2494, 0
        %v2662 = vsel %vm2531, %v2495, 0
        %v2665 = vsel %vm2531, %v2496, 0
        %v2668 = vsel %vm2531, %v2497, 0
        %v2671 = vsel %vm2531, %v2498, 0
        %v2674 = vsel %vm2531, %v2499, 0
        %v2677 = vsel %vm2531, %v2500, 0
        %v2680 = vsel %vm2531, %v2501, 0
        %v2683 = vsel %vm2531, %v2502, 0
        %v2686 = vsel %vm2531, %v2503, 0
        %v2689 = vsel %vm2531, %v2504, 0
        %v2692 = vsel %vm2531, %v2505, 0
        %v2695 = vsel %vm2531, %v2506, 0
        %v2698 = vsel %vm2531, %v2507, 0
        %v2701 = vsel %vm2531, %v2508, 0
        %v2704 = vsel %vm2531, %v2509, 0
        %v2707 = vsel %vm2531, %v2510, 0
        %v2710 = vsel %vm2531, %v2511, 0
        %v2713 = vsel %vm2531, %v2512, 0
        %v2716 = vsel %vm2531, %v2513, 0
        %v2719 = vsel %vm2531, %v2514, 0
        %v2722 = vsel %vm2531, %v2515, 0
        %2724 = vmatprep.subr.mxu0 0.0
        %2725 = vmatpush1.msra.mxu0 0.0
        %2726 = vmatprep.subr.mxu0 0.0
        %2727 = vmatpush1.msra.mxu0 0.0
        %2728 = vmatprep.subr.mxu0 0.0
        %2729 = vmatpush1.msra.mxu0 0.0
        %2730 = vmatprep.subr.mxu0 0.0
        %2731 = vmatpush1.msra.mxu0 0.0
        %2732 = vmatprep.subr.mxu0 0.0
        %2733 = vmatpush1.msra.mxu0 0.0
        %2734 = vmatprep.subr.mxu0 0.0
        %2735 = vmatpush1.msra.mxu0 0.0
        %2736 = vmatprep.subr.mxu0 0.0
        %2737 = vmatpush1.msra.mxu0 0.0
        %2738 = vmatprep.subr.mxu0 0.0
        %2739 = vmatpush1.msra.mxu0 0.0
        %2740 = vmatprep.subr.mxu0 0.0
        %2741 = vmatpush1.msra.mxu0 %v2523
        %2742 = vmatprep.subr.mxu0 0.0
        %2743 = vmatpush1.msra.mxu0 %v2522
        %2744 = vmatprep.subr.mxu0 0.0
        %2745 = vmatpush1.msra.mxu0 %v2521
        %2746 = vmatprep.subr.mxu0 0.0
        %2747 = vmatpush1.msra.mxu0 %v2520
        %2748 = vmatprep.subr.mxu0 0.0
        %2749 = vmatpush1.msra.mxu0 %v2519
        %2750 = vmatprep.subr.mxu0 0.0
        %2751 = vmatpush1.msra.mxu0 %v2518
        %2752 = vmatprep.subr.mxu0 0.0
        %2753 = vmatpush1.msra.mxu0 %v2517
        %2754 = vmatprep.subr.mxu0 0.0
        %2755 = vmatpush1.msra.mxu0 %v2516
        %2756 = vmatprep.subr.mxu0 0.0
        %2757 = vmatpush2.msra.mxu0 0.0
        %2758 = vmatprep.subr.mxu0 0.0
        %2759 = vmatpush2.msra.mxu0 0.0
        %2760 = vmatprep.subr.mxu0 0.0
        %2761 = vmatpush2.msra.mxu0 0.0
        %2762 = vmatprep.subr.mxu0 0.0
        %2763 = vmatpush2.msra.mxu0 0.0
        %2764 = vmatprep.subr.mxu0 0.0
        %2765 = vmatpush2.msra.mxu0 0.0
        %2766 = vmatprep.subr.mxu0 0.0
        %2767 = vmatpush2.msra.mxu0 0.0
        %2768 = vmatprep.subr.mxu0 0.0
        %2769 = vmatpush2.msra.mxu0 0.0
        %2770 = vmatprep.subr.mxu0 0.0
        %2771 = vmatpush2.msra.mxu0 0.0
        %2772 = vmatprep.subr.mxu0 0.0
        %2773 = vmatpush2.msra.mxu0 0.0
        %2774 = vmatprep.subr.mxu0 0.0
        %2775 = vmatpush2.msra.mxu0 0.0
        %2776 = vmatprep.subr.mxu0 0.0
        %2777 = vmatpush2.msra.mxu0 0.0
        %2778 = vmatprep.subr.mxu0 0.0
        %2779 = vmatpush2.msra.mxu0 0.0
        %2780 = vmatprep.subr.mxu0 0.0
        %2781 = vmatpush2.msra.mxu0 0.0
        %2782 = vmatprep.subr.mxu0 0.0
        %2783 = vmatpush2.msra.mxu0 0.0
        %2784 = vmatprep.subr.mxu0 0.0
        %2785 = vmatpush2.msra.mxu0 0.0
        %2786 = vmatprep.subr.mxu0 0.0
        %2787 = vmatpush2.msra.mxu0 0.0
        %2788 = vmatprep.mubr.f32.mxu0 0.0
        %2789 = vmatmul.mubr.f32.gmra.mxu0 %v2533
        %v2790 = vpop.f32.mrf.mxu0
        %v2791 = vadd.f32 %v2529, %v2790
        %v2792 = vpop.f32.mrf.mxu0
        %2793 = vmatprep.mubr.f32.mxu0 0.0
        %2794 = vmatmul.mubr.f32.gmra.mxu0 %v2536
        %v2795 = vpop.f32.mrf.mxu0
        %v2796 = vadd.f32 %v2529, %v2795
        %v2797 = vpop.f32.mrf.mxu0
        %2798 = vmatprep.mubr.f32.mxu0 0.0
        %2799 = vmatmul.mubr.f32.gmra.mxu0 %v2539
        %v2800 = vpop.f32.mrf.mxu0
        %v2801 = vadd.f32 %v2529, %v2800
        %v2802 = vpop.f32.mrf.mxu0
        %2803 = vmatprep.mubr.f32.mxu0 0.0
        %2804 = vmatmul.mubr.f32.gmra.mxu0 %v2542
        %v2805 = vpop.f32.mrf.mxu0
        %v2806 = vadd.f32 %v2529, %v2805
        %v2807 = vpop.f32.mrf.mxu0
        %2808 = vmatprep.mubr.f32.mxu0 0.0
        %2809 = vmatmul.mubr.f32.gmra.mxu0 %v2545
        %v2810 = vpop.f32.mrf.mxu0
        %v2811 = vadd.f32 %v2529, %v2810
        %v2812 = vpop.f32.mrf.mxu0
        %2813 = vmatprep.mubr.f32.mxu0 0.0
        %2814 = vmatmul.mubr.f32.gmra.mxu0 %v2548
        %v2815 = vpop.f32.mrf.mxu0
        %v2816 = vadd.f32 %v2529, %v2815
        %v2817 = vpop.f32.mrf.mxu0
        %2818 = vmatprep.mubr.f32.mxu0 0.0
        %2819 = vmatmul.mubr.f32.gmra.mxu0 %v2551
        %v2820 = vpop.f32.mrf.mxu0
        %v2821 = vadd.f32 %v2529, %v2820
        %v2822 = vpop.f32.mrf.mxu0
        %2823 = vmatprep.mubr.f32.mxu0 0.0
        %2824 = vmatmul.mubr.f32.gmra.mxu0 %v2554
        %v2825 = vpop.f32.mrf.mxu0
        %v2826 = vadd.f32 %v2529, %v2825
        %v2827 = vpop.f32.mrf.mxu0
        %2828 = vmatprep.mubr.f32.mxu0 0.0
        %2829 = vmatmul.mubr.f32.gmra.mxu0 %v2557
        %v2830 = vpop.f32.mrf.mxu0
        %v2831 = vadd.f32 %v2529, %v2830
        %v2832 = vpop.f32.mrf.mxu0
        %2833 = vmatprep.mubr.f32.mxu0 0.0
        %2834 = vmatmul.mubr.f32.gmra.mxu0 %v2560
        %v2835 = vpop.f32.mrf.mxu0
        %v2836 = vadd.f32 %v2529, %v2835
        %v2837 = vpop.f32.mrf.mxu0
        %2838 = vmatprep.mubr.f32.mxu0 0.0
        %2839 = vmatmul.mubr.f32.gmra.mxu0 %v2563
        %v2840 = vpop.f32.mrf.mxu0
        %v2841 = vadd.f32 %v2529, %v2840
        %v2842 = vpop.f32.mrf.mxu0
        %2843 = vmatprep.mubr.f32.mxu0 0.0
        %2844 = vmatmul.mubr.f32.gmra.mxu0 %v2566
        %v2845 = vpop.f32.mrf.mxu0
        %v2846 = vadd.f32 %v2529, %v2845
        %v2847 = vpop.f32.mrf.mxu0
        %2848 = vmatprep.mubr.f32.mxu0 0.0
        %2849 = vmatmul.mubr.f32.gmra.mxu0 %v2569
        %v2850 = vpop.f32.mrf.mxu0
        %v2851 = vadd.f32 %v2529, %v2850
        %v2852 = vpop.f32.mrf.mxu0
        %2853 = vmatprep.mubr.f32.mxu0 0.0
        %2854 = vmatmul.mubr.f32.gmra.mxu0 %v2572
        %v2855 = vpop.f32.mrf.mxu0
        %v2856 = vadd.f32 %v2529, %v2855
        %v2857 = vpop.f32.mrf.mxu0
        %2858 = vmatprep.mubr.f32.mxu0 0.0
        %2859 = vmatmul.mubr.f32.gmra.mxu0 %v2575
        %v2860 = vpop.f32.mrf.mxu0
        %v2861 = vadd.f32 %v2529, %v2860
        %v2862 = vpop.f32.mrf.mxu0
        %2863 = vmatprep.mubr.f32.mxu0 0.0
        %2864 = vmatmul.mubr.f32.gmra.mxu0 %v2578
        %v2865 = vpop.f32.mrf.mxu0
        %v2866 = vadd.f32 %v2529, %v2865
        %v2867 = vpop.f32.mrf.mxu0
        %2868 = vmatprep.mubr.f32.mxu0 0.0
        %2869 = vmatmul.mubr.f32.gmra.mxu0 %v2581
        %v2870 = vpop.f32.mrf.mxu0
        %v2871 = vadd.f32 %v2529, %v2870
        %v2872 = vpop.f32.mrf.mxu0
        %2873 = vmatprep.mubr.f32.mxu0 0.0
        %2874 = vmatmul.mubr.f32.gmra.mxu0 %v2584
        %v2875 = vpop.f32.mrf.mxu0
        %v2876 = vadd.f32 %v2529, %v2875
        %v2877 = vpop.f32.mrf.mxu0
        %2878 = vmatprep.mubr.f32.mxu0 0.0
        %2879 = vmatmul.mubr.f32.gmra.mxu0 %v2587
        %v2880 = vpop.f32.mrf.mxu0
        %v2881 = vadd.f32 %v2529, %v2880
        %v2882 = vpop.f32.mrf.mxu0
        %2883 = vmatprep.mubr.f32.mxu0 0.0
        %2884 = vmatmul.mubr.f32.gmra.mxu0 %v2590
        %v2885 = vpop.f32.mrf.mxu0
        %v2886 = vadd.f32 %v2529, %v2885
        %v2887 = vpop.f32.mrf.mxu0
        %2888 = vmatprep.mubr.f32.mxu0 0.0
        %2889 = vmatmul.mubr.f32.gmra.mxu0 %v2593
        %v2890 = vpop.f32.mrf.mxu0
        %v2891 = vadd.f32 %v2529, %v2890
        %v2892 = vpop.f32.mrf.mxu0
        %2893 = vmatprep.mubr.f32.mxu0 0.0
        %2894 = vmatmul.mubr.f32.gmra.mxu0 %v2596
        %v2895 = vpop.f32.mrf.mxu0
        %v2896 = vadd.f32 %v2529, %v2895
        %v2897 = vpop.f32.mrf.mxu0
        %2898 = vmatprep.mubr.f32.mxu0 0.0
        %2899 = vmatmul.mubr.f32.gmra.mxu0 %v2599
        %v2900 = vpop.f32.mrf.mxu0
        %v2901 = vadd.f32 %v2529, %v2900
        %v2902 = vpop.f32.mrf.mxu0
        %2903 = vmatprep.mubr.f32.mxu0 0.0
        %2904 = vmatmul.mubr.f32.gmra.mxu0 %v2602
        %v2905 = vpop.f32.mrf.mxu0
        %v2906 = vadd.f32 %v2529, %v2905
        %v2907 = vpop.f32.mrf.mxu0
        %2908 = vmatprep.mubr.f32.mxu0 0.0
        %2909 = vmatmul.mubr.f32.gmra.mxu0 %v2605
        %v2910 = vpop.f32.mrf.mxu0
        %v2911 = vadd.f32 %v2529, %v2910
        %v2912 = vpop.f32.mrf.mxu0
        %2913 = vmatprep.mubr.f32.mxu0 0.0
        %2914 = vmatmul.mubr.f32.gmra.mxu0 %v2608
        %v2915 = vpop.f32.mrf.mxu0
        %v2916 = vadd.f32 %v2529, %v2915
        %v2917 = vpop.f32.mrf.mxu0
        %2918 = vmatprep.mubr.f32.mxu0 0.0
        %2919 = vmatmul.mubr.f32.gmra.mxu0 %v2611
        %v2920 = vpop.f32.mrf.mxu0
        %v2921 = vadd.f32 %v2529, %v2920
        %v2922 = vpop.f32.mrf.mxu0
        %2923 = vmatprep.mubr.f32.mxu0 0.0
        %2924 = vmatmul.mubr.f32.gmra.mxu0 %v2614
        %v2925 = vpop.f32.mrf.mxu0
        %v2926 = vadd.f32 %v2529, %v2925
        %v2927 = vpop.f32.mrf.mxu0
        %2928 = vmatprep.mubr.f32.mxu0 0.0
        %2929 = vmatmul.mubr.f32.gmra.mxu0 %v2617
        %v2930 = vpop.f32.mrf.mxu0
        %v2931 = vadd.f32 %v2529, %v2930
        %v2932 = vpop.f32.mrf.mxu0
        %2933 = vmatprep.mubr.f32.mxu0 0.0
        %2934 = vmatmul.mubr.f32.gmra.mxu0 %v2620
        %v2935 = vpop.f32.mrf.mxu0
        %v2936 = vadd.f32 %v2529, %v2935
        %v2937 = vpop.f32.mrf.mxu0
        %2938 = vmatprep.mubr.f32.mxu0 0.0
        %2939 = vmatmul.mubr.f32.gmra.mxu0 %v2623
        %v2940 = vpop.f32.mrf.mxu0
        %v2941 = vadd.f32 %v2529, %v2940
        %v2942 = vpop.f32.mrf.mxu0
        %2943 = vmatprep.mubr.f32.mxu0 0.0
        %2944 = vmatmul.mubr.f32.gmra.mxu0 %v2626
        %v2945 = vpop.f32.mrf.mxu0
        %v2946 = vadd.f32 %v2529, %v2945
        %v2947 = vpop.f32.mrf.mxu0
        %2948 = vmatprep.mubr.f32.mxu0 0.0
        %2949 = vmatmul.mubr.f32.gmra.mxu0 %v2629
        %v2950 = vpop.f32.mrf.mxu0
        %v2951 = vadd.f32 %v2529, %v2950
        %v2952 = vpop.f32.mrf.mxu0
        %2953 = vmatprep.mubr.f32.mxu0 0.0
        %2954 = vmatmul.mubr.f32.gmra.mxu0 %v2632
        %v2955 = vpop.f32.mrf.mxu0
        %v2956 = vadd.f32 %v2529, %v2955
        %v2957 = vpop.f32.mrf.mxu0
        %2958 = vmatprep.mubr.f32.mxu0 0.0
        %2959 = vmatmul.mubr.f32.gmra.mxu0 %v2635
        %v2960 = vpop.f32.mrf.mxu0
        %v2961 = vadd.f32 %v2529, %v2960
        %v2962 = vpop.f32.mrf.mxu0
        %2963 = vmatprep.mubr.f32.mxu0 0.0
        %2964 = vmatmul.mubr.f32.gmra.mxu0 %v2638
        %v2965 = vpop.f32.mrf.mxu0
        %v2966 = vadd.f32 %v2529, %v2965
        %v2967 = vpop.f32.mrf.mxu0
        %2968 = vmatprep.mubr.f32.mxu0 0.0
        %2969 = vmatmul.mubr.f32.gmra.mxu0 %v2641
        %v2970 = vpop.f32.mrf.mxu0
        %v2971 = vadd.f32 %v2529, %v2970
        %v2972 = vpop.f32.mrf.mxu0
        %2973 = vmatprep.mubr.f32.mxu0 0.0
        %2974 = vmatmul.mubr.f32.gmra.mxu0 %v2644
        %v2975 = vpop.f32.mrf.mxu0
        %v2976 = vadd.f32 %v2529, %v2975
        %v2977 = vpop.f32.mrf.mxu0
        %2978 = vmatprep.mubr.f32.mxu0 0.0
        %2979 = vmatmul.mubr.f32.gmra.mxu0 %v2647
        %v2980 = vpop.f32.mrf.mxu0
        %v2981 = vadd.f32 %v2529, %v2980
        %v2982 = vpop.f32.mrf.mxu0
        %2983 = vmatprep.mubr.f32.mxu0 0.0
        %2984 = vmatmul.mubr.f32.gmra.mxu0 %v2650
        %v2985 = vpop.f32.mrf.mxu0
        %v2986 = vadd.f32 %v2529, %v2985
        %v2987 = vpop.f32.mrf.mxu0
        %2988 = vmatprep.mubr.f32.mxu0 0.0
        %2989 = vmatmul.mubr.f32.gmra.mxu0 %v2653
        %v2990 = vpop.f32.mrf.mxu0
        %v2991 = vadd.f32 %v2529, %v2990
        %v2992 = vpop.f32.mrf.mxu0
        %2993 = vmatprep.mubr.f32.mxu0 0.0
        %2994 = vmatmul.mubr.f32.gmra.mxu0 %v2656
        %v2995 = vpop.f32.mrf.mxu0
        %v2996 = vadd.f32 %v2529, %v2995
        %v2997 = vpop.f32.mrf.mxu0
        %2998 = vmatprep.mubr.f32.mxu0 0.0
        %2999 = vmatmul.mubr.f32.gmra.mxu0 %v2659
        %v3000 = vpop.f32.mrf.mxu0
        %v3001 = vadd.f32 %v2529, %v3000
        %v3002 = vpop.f32.mrf.mxu0
        %3003 = vmatprep.mubr.f32.mxu0 0.0
        %3004 = vmatmul.mubr.f32.gmra.mxu0 %v2662
        %v3005 = vpop.f32.mrf.mxu0
        %v3006 = vadd.f32 %v2529, %v3005
        %v3007 = vpop.f32.mrf.mxu0
        %3008 = vmatprep.mubr.f32.mxu0 0.0
        %3009 = vmatmul.mubr.f32.gmra.mxu0 %v2665
        %v3010 = vpop.f32.mrf.mxu0
        %v3011 = vadd.f32 %v2529, %v3010
        %v3012 = vpop.f32.mrf.mxu0
        %3013 = vmatprep.mubr.f32.mxu0 0.0
        %3014 = vmatmul.mubr.f32.gmra.mxu0 %v2668
        %v3015 = vpop.f32.mrf.mxu0
        %v3016 = vadd.f32 %v2529, %v3015
        %v3017 = vpop.f32.mrf.mxu0
        %3018 = vmatprep.mubr.f32.mxu0 0.0
        %3019 = vmatmul.mubr.f32.gmra.mxu0 %v2671
        %v3020 = vpop.f32.mrf.mxu0
        %v3021 = vadd.f32 %v2529, %v3020
        %v3022 = vpop.f32.mrf.mxu0
        %3023 = vmatprep.mubr.f32.mxu0 0.0
        %3024 = vmatmul.mubr.f32.gmra.mxu0 %v2674
        %v3025 = vpop.f32.mrf.mxu0
        %v3026 = vadd.f32 %v2529, %v3025
        %v3027 = vpop.f32.mrf.mxu0
        %3028 = vmatprep.mubr.f32.mxu0 0.0
        %3029 = vmatmul.mubr.f32.gmra.mxu0 %v2677
        %v3030 = vpop.f32.mrf.mxu0
        %v3031 = vadd.f32 %v2529, %v3030
        %v3032 = vpop.f32.mrf.mxu0
        %3033 = vmatprep.mubr.f32.mxu0 0.0
        %3034 = vmatmul.mubr.f32.gmra.mxu0 %v2680
        %v3035 = vpop.f32.mrf.mxu0
        %v3036 = vadd.f32 %v2529, %v3035
        %v3037 = vpop.f32.mrf.mxu0
        %3038 = vmatprep.mubr.f32.mxu0 0.0
        %3039 = vmatmul.mubr.f32.gmra.mxu0 %v2683
        %v3040 = vpop.f32.mrf.mxu0
        %v3041 = vadd.f32 %v2529, %v3040
        %v3042 = vpop.f32.mrf.mxu0
        %3043 = vmatprep.mubr.f32.mxu0 0.0
        %3044 = vmatmul.mubr.f32.gmra.mxu0 %v2686
        %v3045 = vpop.f32.mrf.mxu0
        %v3046 = vadd.f32 %v2529, %v3045
        %v3047 = vpop.f32.mrf.mxu0
        %3048 = vmatprep.mubr.f32.mxu0 0.0
        %3049 = vmatmul.mubr.f32.gmra.mxu0 %v2689
        %v3050 = vpop.f32.mrf.mxu0
        %v3051 = vadd.f32 %v2529, %v3050
        %v3052 = vpop.f32.mrf.mxu0
        %3053 = vmatprep.mubr.f32.mxu0 0.0
        %3054 = vmatmul.mubr.f32.gmra.mxu0 %v2692
        %v3055 = vpop.f32.mrf.mxu0
        %v3056 = vadd.f32 %v2529, %v3055
        %v3057 = vpop.f32.mrf.mxu0
        %3058 = vmatprep.mubr.f32.mxu0 0.0
        %3059 = vmatmul.mubr.f32.gmra.mxu0 %v2695
        %v3060 = vpop.f32.mrf.mxu0
        %v3061 = vadd.f32 %v2529, %v3060
        %v3062 = vpop.f32.mrf.mxu0
        %3063 = vmatprep.mubr.f32.mxu0 0.0
        %3064 = vmatmul.mubr.f32.gmra.mxu0 %v2698
        %v3065 = vpop.f32.mrf.mxu0
        %v3066 = vadd.f32 %v2529, %v3065
        %v3067 = vpop.f32.mrf.mxu0
        %3068 = vmatprep.mubr.f32.mxu0 0.0
        %3069 = vmatmul.mubr.f32.gmra.mxu0 %v2701
        %v3070 = vpop.f32.mrf.mxu0
        %v3071 = vadd.f32 %v2529, %v3070
        %v3072 = vpop.f32.mrf.mxu0
        %3073 = vmatprep.mubr.f32.mxu0 0.0
        %3074 = vmatmul.mubr.f32.gmra.mxu0 %v2704
        %v3075 = vpop.f32.mrf.mxu0
        %v3076 = vadd.f32 %v2529, %v3075
        %v3077 = vpop.f32.mrf.mxu0
        %3078 = vmatprep.mubr.f32.mxu0 0.0
        %3079 = vmatmul.mubr.f32.gmra.mxu0 %v2707
        %v3080 = vpop.f32.mrf.mxu0
        %v3081 = vadd.f32 %v2529, %v3080
        %v3082 = vpop.f32.mrf.mxu0
        %3083 = vmatprep.mubr.f32.mxu0 0.0
        %3084 = vmatmul.mubr.f32.gmra.mxu0 %v2710
        %v3085 = vpop.f32.mrf.mxu0
        %v3086 = vadd.f32 %v2529, %v3085
        %v3087 = vpop.f32.mrf.mxu0
        %3088 = vmatprep.mubr.f32.mxu0 0.0
        %3089 = vmatmul.mubr.f32.gmra.mxu0 %v2713
        %v3090 = vpop.f32.mrf.mxu0
        %v3091 = vadd.f32 %v2529, %v3090
        %v3092 = vpop.f32.mrf.mxu0
        %3093 = vmatprep.mubr.f32.mxu0 0.0
        %3094 = vmatmul.mubr.f32.gmra.mxu0 %v2716
        %v3095 = vpop.f32.mrf.mxu0
        %v3096 = vadd.f32 %v2529, %v3095
        %v3097 = vpop.f32.mrf.mxu0
        %3098 = vmatprep.mubr.f32.mxu0 0.0
        %3099 = vmatmul.mubr.f32.gmra.mxu0 %v2719
        %v3100 = vpop.f32.mrf.mxu0
        %v3101 = vadd.f32 %v2529, %v3100
        %v3102 = vpop.f32.mrf.mxu0
        %3103 = vmatprep.mubr.f32.mxu0 0.0
        %3104 = vmatmul.mubr.f32.gmra.mxu0 %v2722
        %v3105 = vpop.f32.mrf.mxu0
        %v3106 = vadd.f32 %v2529, %v3105
        %v3107 = vpop.f32.mrf.mxu0
        %3108 = vdwg.mxu0
        %3109 = vxpose.xlu0.b32.start [1/16] %v2791, 128
        %3110 = vxpose.xlu0.b32.cont [2/16] %v2796, 128
        %3111 = vxpose.xlu0.b32.cont [3/16] %v2801, 128
        %3112 = vxpose.xlu0.b32.cont [4/16] %v2806, 128
        %3113 = vxpose.xlu0.b32.cont [5/16] %v2811, 128
        %3114 = vxpose.xlu0.b32.cont [6/16] %v2816, 128
        %3115 = vxpose.xlu0.b32.cont [7/16] %v2821, 128
        %3116 = vxpose.xlu0.b32.cont [8/16] %v2826, 128
        %3117 = vxpose.xlu0.b32.cont [9/16] %v2831, 128
        %3118 = vxpose.xlu0.b32.cont [10/16] %v2836, 128
        %3119 = vxpose.xlu0.b32.cont [11/16] %v2841, 128
        %3120 = vxpose.xlu0.b32.cont [12/16] %v2846, 128
        %3121 = vxpose.xlu0.b32.cont [13/16] %v2851, 128
        %3122 = vxpose.xlu0.b32.cont [14/16] %v2856, 128
        %3123 = vxpose.xlu0.b32.cont [15/16] %v2861, 128
        %3124 = vxpose.xlu0.b32.end [16/16] %v2866, 128
        %v3125 = vpop.trf.xlu0
        %v3126 = vpop.trf.xlu0
        %v3127 = vpop.trf.xlu0
        %v3128 = vpop.trf.xlu0
        %v3129 = vpop.trf.xlu0
        %v3130 = vpop.trf.xlu0
        %v3131 = vpop.trf.xlu0
        %v3132 = vpop.trf.xlu0
        %v3133 = vpop.trf.xlu0
        %v3134 = vpop.trf.xlu0
        %v3135 = vpop.trf.xlu0
        %v3136 = vpop.trf.xlu0
        %v3137 = vpop.trf.xlu0
        %v3138 = vpop.trf.xlu0
        %v3139 = vpop.trf.xlu0
        %v3140 = vpop.trf.xlu0
        %3141 = vxpose.xlu0.b32.start [1/16] %v2871, 128
        %3142 = vxpose.xlu0.b32.cont [2/16] %v2876, 128
        %3143 = vxpose.xlu0.b32.cont [3/16] %v2881, 128
        %3144 = vxpose.xlu0.b32.cont [4/16] %v2886, 128
        %3145 = vxpose.xlu0.b32.cont [5/16] %v2891, 128
        %3146 = vxpose.xlu0.b32.cont [6/16] %v2896, 128
        %3147 = vxpose.xlu0.b32.cont [7/16] %v2901, 128
        %3148 = vxpose.xlu0.b32.cont [8/16] %v2906, 128
        %3149 = vxpose.xlu0.b32.cont [9/16] %v2911, 128
        %3150 = vxpose.xlu0.b32.cont [10/16] %v2916, 128
        %3151 = vxpose.xlu0.b32.cont [11/16] %v2921, 128
        %3152 = vxpose.xlu0.b32.cont [12/16] %v2926, 128
        %3153 = vxpose.xlu0.b32.cont [13/16] %v2931, 128
        %3154 = vxpose.xlu0.b32.cont [14/16] %v2936, 128
        %3155 = vxpose.xlu0.b32.cont [15/16] %v2941, 128
        %3156 = vxpose.xlu0.b32.end [16/16] %v2946, 128
        %v3157 = vpop.trf.xlu0
        %v3158 = vpop.trf.xlu0
        %v3159 = vpop.trf.xlu0
        %v3160 = vpop.trf.xlu0
        %v3161 = vpop.trf.xlu0
        %v3162 = vpop.trf.xlu0
        %v3163 = vpop.trf.xlu0
        %v3164 = vpop.trf.xlu0
        %v3165 = vpop.trf.xlu0
        %v3166 = vpop.trf.xlu0
        %v3167 = vpop.trf.xlu0
        %v3168 = vpop.trf.xlu0
        %v3169 = vpop.trf.xlu0
        %v3170 = vpop.trf.xlu0
        %v3171 = vpop.trf.xlu0
        %v3172 = vpop.trf.xlu0
        %3173 = vxpose.xlu0.b32.start [1/16] %v2951, 128
        %3174 = vxpose.xlu0.b32.cont [2/16] %v2956, 128
        %3175 = vxpose.xlu0.b32.cont [3/16] %v2961, 128
        %3176 = vxpose.xlu0.b32.cont [4/16] %v2966, 128
        %3177 = vxpose.xlu0.b32.cont [5/16] %v2971, 128
        %3178 = vxpose.xlu0.b32.cont [6/16] %v2976, 128
        %3179 = vxpose.xlu0.b32.cont [7/16] %v2981, 128
        %3180 = vxpose.xlu0.b32.cont [8/16] %v2986, 128
        %3181 = vxpose.xlu0.b32.cont [9/16] %v2991, 128
        %3182 = vxpose.xlu0.b32.cont [10/16] %v2996, 128
        %3183 = vxpose.xlu0.b32.cont [11/16] %v3001, 128
        %3184 = vxpose.xlu0.b32.cont [12/16] %v3006, 128
        %3185 = vxpose.xlu0.b32.cont [13/16] %v3011, 128
        %3186 = vxpose.xlu0.b32.cont [14/16] %v3016, 128
        %3187 = vxpose.xlu0.b32.cont [15/16] %v3021, 128
        %3188 = vxpose.xlu0.b32.end [16/16] %v3026, 128
        %v3189 = vpop.trf.xlu0
        %v3190 = vpop.trf.xlu0
        %v3191 = vpop.trf.xlu0
        %v3192 = vpop.trf.xlu0
        %v3193 = vpop.trf.xlu0
        %v3194 = vpop.trf.xlu0
        %v3195 = vpop.trf.xlu0
        %v3196 = vpop.trf.xlu0
        %v3197 = vpop.trf.xlu0
        %v3198 = vpop.trf.xlu0
        %v3199 = vpop.trf.xlu0
        %v3200 = vpop.trf.xlu0
        %v3201 = vpop.trf.xlu0
        %v3202 = vpop.trf.xlu0
        %v3203 = vpop.trf.xlu0
        %v3204 = vpop.trf.xlu0
        %3205 = vxpose.xlu0.b32.start [1/16] %v3031, 128
        %3206 = vxpose.xlu0.b32.cont [2/16] %v3036, 128
        %3207 = vxpose.xlu0.b32.cont [3/16] %v3041, 128
        %3208 = vxpose.xlu0.b32.cont [4/16] %v3046, 128
        %3209 = vxpose.xlu0.b32.cont [5/16] %v3051, 128
        %3210 = vxpose.xlu0.b32.cont [6/16] %v3056, 128
        %3211 = vxpose.xlu0.b32.cont [7/16] %v3061, 128
        %3212 = vxpose.xlu0.b32.cont [8/16] %v3066, 128
        %3213 = vxpose.xlu0.b32.cont [9/16] %v3071, 128
        %3214 = vxpose.xlu0.b32.cont [10/16] %v3076, 128
        %3215 = vxpose.xlu0.b32.cont [11/16] %v3081, 128
        %3216 = vxpose.xlu0.b32.cont [12/16] %v3086, 128
        %3217 = vxpose.xlu0.b32.cont [13/16] %v3091, 128
        %3218 = vxpose.xlu0.b32.cont [14/16] %v3096, 128
        %3219 = vxpose.xlu0.b32.cont [15/16] %v3101, 128
        %3220 = vxpose.xlu0.b32.end [16/16] %v3106, 128
        %v3221 = vpop.trf.xlu0
        %v3222 = vpop.trf.xlu0
        %v3223 = vpop.trf.xlu0
        %v3224 = vpop.trf.xlu0
        %v3225 = vpop.trf.xlu0
        %v3226 = vpop.trf.xlu0
        %v3227 = vpop.trf.xlu0
        %v3228 = vpop.trf.xlu0
        %v3229 = vpop.trf.xlu0
        %v3230 = vpop.trf.xlu0
        %v3231 = vpop.trf.xlu0
        %v3232 = vpop.trf.xlu0
        %v3233 = vpop.trf.xlu0
        %v3234 = vpop.trf.xlu0
        %v3235 = vpop.trf.xlu0
        %v3236 = vpop.trf.xlu0
        %3237 = vst [vmem:[%s349] sm:$0xff] %v3125
        %3238 = vst [vmem:[%s349 + $0x8] sm:$0xff] %v3157
        %3239 = vst [vmem:[%s349 + $0x10] sm:$0xff] %v3189
        %3240 = vst [vmem:[%s349 + $0x18] sm:$0xff] %v3221
        %3241 = vst [vmem:[%s349 + $0x20] sm:$0xff] %v3126
        %3242 = vst [vmem:[%s349 + $0x28] sm:$0xff] %v3158
        %3243 = vst [vmem:[%s349 + $0x30] sm:$0xff] %v3190
        %3244 = vst [vmem:[%s349 + $0x38] sm:$0xff] %v3222
        %3245 = vst [vmem:[%s349 + $0x40] sm:$0xff] %v3127
        %3246 = vst [vmem:[%s349 + $0x48] sm:$0xff] %v3159
        %3247 = vst [vmem:[%s349 + $0x50] sm:$0xff] %v3191
        %3248 = vst [vmem:[%s349 + $0x58] sm:$0xff] %v3223
        %3249 = vst [vmem:[%s349 + $0x60] sm:$0xff] %v3128
        %3250 = vst [vmem:[%s349 + $0x68] sm:$0xff] %v3160
        %3251 = vst [vmem:[%s349 + $0x70] sm:$0xff] %v3192
        %3252 = vst [vmem:[%s349 + $0x78] sm:$0xff] %v3224
        %s3253 = sand.u32 %s226, 1
        %s3254 = scalar_lea.sflag [#allocation3], %s3253
        %s3255 = sand.u32 %s226, 1
        %s3256 = smul.addr %s3255, 128
        %s3257 = scalar_lea.vmem [#allocation2], %s3256
        // Predicated region
        $region53: #{tpu_custom_call.1} parent=51 // pred_check
          %p3258 = pneg %p236
        $region54: #{tpu_custom_call.1} parent=51 // pred_check_branch
          %3260 = sbr.rel (%p3258) target = $region56
        $region55: #{tpu_custom_call.1} parent=51 // pred_region
          %s3261 = smul.u32 4, %s27
          %s3263 = ssub.s32 2048, 2048
          %3264 = vsyncadd %s3254, %s3263
          %s3265 = smul.addr %s26, 16
          %s3266 = sadd.s32 %s3261, %s3265
          %s3267 = smul.addr %s3266, 128
          %s3268 = scalar_lea.hbm %s8, %s3267
          %s3269 = sshll.u32 %s3257, 4
          %s3270 = int_to_ptr.vmem [resolvable:$true] %s3269
          %3275 = dma.vmem_to_hbm [thread:$0]  %s3270, 2048, %s3268, %s3254, 512, 512, 32
        $region56: #{tpu_custom_call.1} parent=51 // pred_fallthru
          _
      $region52: #{tpu_custom_call.1} parent=5 // pred_fallthru
        _
      %p3276 = scmp.le.s32.totalorder 2, %s17
      // Predicated region
      $region57: #{tpu_custom_call.1} parent=5 // pred_check
        %p3277 = pneg %p3276
      $region58: #{tpu_custom_call.1} parent=5 // pred_check_branch
        %3279 = sbr.rel (%p3277) target = $region60
      $region59: #{tpu_custom_call.1} parent=5 // pred_region
        %s3280 = ssub.s32 %s17, 2
        // Predicated region
        $region61: #{tpu_custom_call.1} parent=59 // pred_check
          %p3281 = pneg %p242
        $region62: #{tpu_custom_call.1} parent=59 // pred_check_branch
          %3283 = sbr.rel (%p3281) target = $region64
        $region63: #{tpu_custom_call.1} parent=59 // pred_region
          %s3284 = sand.u32 %s227, 1
          %s3285 = scalar_lea.sflag [#allocation3], %s3284
          %s3286 = sand.u32 %s227, 1
          %s3287 = smul.addr %s3286, 128
          %s3288 = scalar_lea.vmem [#allocation2], %s3287
          %3289 = dma.done %s3285, 2048
        $region64: #{tpu_custom_call.1} parent=59 // pred_fallthru
          _
      $region60: #{tpu_custom_call.1} parent=5 // pred_fallthru
        _
    $region6: #{tpu_custom_call.1} parent=1 // loop_footer
      %s21 = sadd.s32 1, %s17
    $region7: #{tpu_custom_call.1} parent=1 // loop_footer_branch
      %16 = sbr.rel target = $region3
    $region8: #{tpu_custom_call.1} parent=1 // loop_exit
      _
    %3290 = vsyncpa [#allocation3], 1
    %s3291 = scalar_lea.sflag [#allocation3], 1
    %3292 = vsyncpa %s3291, 1

</llo_original>
